<compile_context>
chip_gen: v7x
topology: tpu7x:2x2x1
jax: 0.10.0
libtpu: 0.0.40
codegen_flags: <defaults>
</compile_context>

<pallas_src>
import math
import functools

import jax
import jax.numpy as jnp
from jax.experimental import pallas as pl
from jax.experimental.pallas import tpu as pltpu


def _round_up(x, m):
    return (x + m - 1) // m * m


def _pairwise_rank_kernel(work_ref, col_ref, row_ref, out_ref, *, exp_weighted):
    i_blk = pl.program_id(0)
    j_blk = pl.program_id(1)

    @pl.when(j_blk == 0)
    def _init():
        out_ref[...] = jnp.zeros_like(out_ref)

    # Tile skip: with target-sorted inputs roughly half the (i, j) block pairs
    # contain no pair with target[j] > target[i]; the wrapper precomputed that.
    @pl.when(work_ref[i_blk * pl.num_programs(1) + j_blk] != 0)
    def _compute():
        a_i = col_ref[:, 0:1]          # (block_i, 1)  0.5 * (input[i] - 1)
        t_i = col_ref[:, 1:2]          # (block_i, 1)  target[i]  (+inf padding)
        b_j = row_ref[0:1, :]          # (1, block_j)  0.5 * input[j]
        t_j = row_ref[1:2, :]          # (1, block_j)  target[j]  (-inf padding)

        # sigmoid(-(x_j - x_i + 1)) == 0.5 * (tanh(0.5*(x_i - x_j - 1)) + 1)
        th = jnp.tanh(a_i - b_j)       # (block_i, block_j), tanh on EUP
        mask = t_j > t_i               # pair selection + padding validity

        if exp_weighted:
            u_i = col_ref[:, 2:3]      # (block_i, 1)  0.5 * (exp(target[i]) - 1)
            w_j = row_ref[2:3, :]      # (1, block_j)  exp(target[j]) - 1
            val = (u_i * w_j) * (th + 1.0)           # == w_i * w_j * sigmoid(...)
            contrib = jnp.where(mask, jnp.maximum(val, 0.0), 0.0)
        else:
            # sigmoid >= 0, so the max() is a no-op; the 0.5 is folded into the
            # wrapper-side scale (kernel accumulates 2*sigmoid).
            contrib = jnp.where(mask, th + 1.0, 0.0)

        # Sublane reduce this tile and accumulate into the resident output row.
        out_ref[...] += jnp.sum(contrib, axis=0, keepdims=True)


def my_loss(inp, tgt, *, exp_weighted=False, block_i=512, block_j=2048):
    """Pallas implementation of MyLoss.forward(input, target)."""
    assert inp.ndim == 1 and tgt.shape == inp.shape
    n = inp.shape[0]
    if exp_weighted:
        scale = 2.0 / (n * (math.e - 1.0)) ** 2
    else:
        # kernel accumulates (tanh + 1) == 2 * sigmoid, so fold the 0.5 here.
        scale = 1.0 / float(n) ** 2

    assert block_i % 8 == 0 and block_j % 128 == 0 and block_j % block_i == 0

    inp = inp.astype(jnp.float32)
    tgt = tgt.astype(jnp.float32)

    # Sort by target (loss is permutation invariant) so lower-triangular block
    # pairs can be skipped inside the kernel.
    order = jnp.argsort(tgt)
    inp = inp[order]
    tgt = tgt[order]

    # Shrink block_j for small problems while keeping it a multiple of both
    # 128 and block_i (block_j as asserted is already a multiple of the lcm).
    align = block_i * 128 // math.gcd(block_i, 128)
    block_j = min(block_j, _round_up(n, align))
    n_pad = _round_up(n, block_j)
    pad = n_pad - n

    # Per-vector algebra hoisted out of the kernel entirely.
    a_i = jnp.pad(0.5 * (inp - 1.0), (0, pad))                     # 0.5*(x_i - 1)
    b_j = jnp.pad(0.5 * inp, (0, pad))                             # 0.5*x_j
    t_cmp_i = jnp.pad(tgt, (0, pad), constant_values=jnp.inf)      # row never selects
    t_cmp_j = jnp.pad(tgt, (0, pad), constant_values=-jnp.inf)     # col never selected

    cols = [a_i, t_cmp_i]
    rows = [b_j, t_cmp_j]
    if exp_weighted:
        w = jnp.exp(tgt) - 1.0                                     # hoisted exp
        cols.append(jnp.pad(0.5 * w, (0, pad)))                    # 0.5 folded here
        rows.append(jnp.pad(w, (0, pad)))
    col_pack = jnp.stack(cols, axis=1)            # (n_pad, C) -> one i-side DMA
    row_pack = jnp.stack(rows, axis=0)            # (C, n_pad) -> one j-side DMA
    c = col_pack.shape[1]

    n_i = n_pad // block_i
    n_j = n_pad // block_j

    # Per-block "any pair with t_j > t_i" table (all-padding blocks give
    # +inf / -inf extrema and are skipped automatically).
    min_ti = t_cmp_i.reshape(n_i, block_i).min(axis=1)
    max_tj = t_cmp_j.reshape(n_j, block_j).max(axis=1)
    work = (max_tj[None, :] > min_ti[:, None]).reshape(-1).astype(jnp.int32)

    kernel = functools.partial(_pairwise_rank_kernel,
                               exp_weighted=bool(exp_weighted))

    # Per-i-block partial sums, lane-dense (1, block_j) blocks resident across
    # the j sweep; final scalar reduction + scaling happens in JAX.
    partials = pl.pallas_call(
        kernel,
        out_shape=jax.ShapeDtypeStruct((1, n_i * block_j), jnp.float32),
        grid_spec=pltpu.PrefetchScalarGridSpec(
            num_scalar_prefetch=1,
            grid=(n_i, n_j),
            in_specs=[
                pl.BlockSpec((block_i, c), lambda i, j, work: (i, 0)),  # i-side pack
                pl.BlockSpec((c, block_j), lambda i, j, work: (0, j)),  # j-side pack
            ],
            out_specs=pl.BlockSpec((1, block_j), lambda i, j, work: (0, i)),
        ),
        compiler_params=pltpu.CompilerParams(
            dimension_semantics=("parallel", "arbitrary"),
            vmem_limit_bytes=64 * 1024 * 1024),
    )(work, col_pack, row_pack)

    return scale * jnp.sum(partials)


def _reference_loss(inp, tgt, *, exp_weighted=False):
    """Pure-JAX reference mirroring the torch loop (vectorized)."""
    n = inp.shape[0]
    inp = inp.astype(jnp.float32)
    tgt = tgt.astype(jnp.float32)
    mask = tgt[None, :] > tgt[:, None]                       # [i, j]
    x = jax.nn.sigmoid(-(inp[None, :] - inp[:, None] + 1.0))
    if exp_weighted:
        x = (jnp.exp(tgt[:, None]) - 1.0) * (jnp.exp(tgt[None, :]) - 1.0) * x
        scale = 2.0 / (n * (math.e - 1.0)) ** 2
    else:
        scale = 2.0 / float(n) ** 2
    x = jnp.where(mask, jnp.maximum(x, 0.0), 0.0)
    return scale * jnp.sum(x)


if __name__ == "__main__":
    key = jax.random.PRNGKey(0)
    k_inp, k_tgt, k_inp2, k_tgt2 = jax.random.split(key, 4)

    # Small 1-D ranking-score inputs, deliberately not a tile multiple so the
    # padding / validity-fold path is exercised.
    n = 300
    inp = jax.random.normal(k_inp, (n,), dtype=jnp.float32)
    tgt = jax.random.uniform(k_tgt, (n,), dtype=jnp.float32)

    for exp_weighted in (False, True):
        loss = jax.block_until_ready(my_loss(inp, tgt, exp_weighted=exp_weighted))
        ref = _reference_loss(inp, tgt, exp_weighted=exp_weighted)
        assert jnp.allclose(loss, ref, rtol=1e-4, atol=1e-5), (exp_weighted, loss, ref)

    # Second size with normally distributed targets (negative exp-weights hit
    # the max(x, 0) clamp) and an explicit small-block call that forces a
    # multi-block j reduction plus real tile skipping (grid (6, 3)).
    n2 = 700
    inp2 = jax.random.normal(k_inp2, (n2,), dtype=jnp.float32)
    tgt2 = jax.random.normal(k_tgt2, (n2,), dtype=jnp.float32)

    loss2 = jax.block_until_ready(my_loss(inp2, tgt2, exp_weighted=True))
    ref2 = _reference_loss(inp2, tgt2, exp_weighted=True)
    assert jnp.allclose(loss2, ref2, rtol=1e-4, atol=1e-5), (loss2, ref2)

    loss3 = jax.block_until_ready(
        my_loss(inp2, tgt2, exp_weighted=True, block_i=128, block_j=256))
    assert jnp.allclose(loss3, ref2, rtol=1e-4, atol=1e-5), (loss3, ref2)

    loss4 = jax.block_until_ready(
        my_loss(inp2, tgt2, exp_weighted=False, block_i=128, block_j=256))
    ref4 = _reference_loss(inp2, tgt2, exp_weighted=False)
    assert jnp.allclose(loss4, ref4, rtol=1e-4, atol=1e-5), (loss4, ref4)

    print("KERNEL_OK")
</pallas_src>

<mosaic_0001>
module attributes {stable_mosaic.version = 11 : i64} {
  func.func @_pairwise_rank_kernel(%arg0: i32, %arg1: i32, %arg2: memref<1xi32, #tpu.memory_space<smem>>, %arg3: memref<512x2xf32, #tpu.memory_space<vmem>>, %arg4: memref<2x512xf32, #tpu.memory_space<vmem>>, %arg5: memref<1x512xf32, #tpu.memory_space<vmem>>) attributes {dimension_semantics = [#tpu.dimension_semantics<parallel>, #tpu.dimension_semantics<arbitrary>], iteration_bounds = array<i64: 1, 1>, scalar_prefetch = 1 : i64, scratch_operands = 0 : i64, tpu.core_type = #tpu.core_type<tc>, window_params = [{transform_indices = @transform_0, window_bounds = array<i64: 512, 2>}, {transform_indices = @transform_1, window_bounds = array<i64: 2, 512>}, {transform_indices = @transform_2, window_bounds = array<i64: 1, 512>}]} {
    %c0_i32 = arith.constant 0 : i32
    %0 = arith.cmpi eq, %arg1, %c0_i32 : i32
    %1 = arith.extui %0 : i1 to i32
    %c0_i32_0 = arith.constant 0 : i32
    %2 = arith.cmpi ne, %1, %c0_i32_0 : i32
    scf.if %2 {
      %cst = arith.constant 0.000000e+00 : f32
      %10 = vector.broadcast %cst : f32 to vector<1x512xf32>
      %c0 = arith.constant 0 : index
      %c0_3 = arith.constant 0 : index
      %11 = vector.load %arg5[%c0, %c0_3] : memref<1x512xf32, #tpu.memory_space<vmem>>, vector<1x512xf32>
      tpu.vector_store %arg5[%c0, %c0_3], %10 {strides = array<i32>} : memref<1x512xf32, #tpu.memory_space<vmem>>, vector<1x512xf32>,
    } else {
    }
    %c1_i32 = arith.constant 1 : i32
    %3 = arith.muli %arg0, %c1_i32 : i32
    %4 = arith.addi %3, %arg1 : i32
    %5 = arith.index_cast %4 : i32 to index
    %6 = memref.load %arg2[%5] : memref<1xi32, #tpu.memory_space<smem>>
    %c0_i32_1 = arith.constant 0 : i32
    %7 = arith.cmpi ne, %6, %c0_i32_1 : i32
    %8 = arith.extui %7 : i1 to i32
    %c0_i32_2 = arith.constant 0 : i32
    %9 = arith.cmpi ne, %8, %c0_i32_2 : i32
    scf.if %9 {
      %c0 = arith.constant 0 : index
      %c0_3 = arith.constant 0 : index
      %10 = vector.load %arg3[%c0, %c0_3] : memref<512x2xf32, #tpu.memory_space<vmem>>, vector<512x1xf32>
      %c0_4 = arith.constant 0 : index
      %c1 = arith.constant 1 : index
      %11 = vector.load %arg3[%c0_4, %c1] : memref<512x2xf32, #tpu.memory_space<vmem>>, vector<512x1xf32>
      %c0_5 = arith.constant 0 : index
      %c0_6 = arith.constant 0 : index
      %12 = vector.load %arg4[%c0_5, %c0_6] : memref<2x512xf32, #tpu.memory_space<vmem>>, vector<1x512xf32>
      %c1_7 = arith.constant 1 : index
      %c0_8 = arith.constant 0 : index
      %13 = vector.load %arg4[%c1_7, %c0_8] : memref<2x512xf32, #tpu.memory_space<vmem>>, vector<1x512xf32>
      %14 = vector.broadcast %10 : vector<512x1xf32> to vector<512x512xf32>
      %15 = vector.broadcast %12 : vector<1x512xf32> to vector<512x512xf32>
      %16 = arith.subf %14, %15 : vector<512x512xf32>
      %17 = math.tanh %16 : vector<512x512xf32>
      %18 = vector.broadcast %13 : vector<1x512xf32> to vector<512x512xf32>
      %19 = vector.broadcast %11 : vector<512x1xf32> to vector<512x512xf32>
      %20 = arith.cmpf ogt, %18, %19 : vector<512x512xf32>
      %cst = arith.constant 1.000000e+00 : f32
      %21 = vector.broadcast %cst : f32 to vector<512x512xf32>
      %22 = arith.addf %17, %21 : vector<512x512xf32>
      %cst_9 = arith.constant 0.000000e+00 : f32
      %23 = vector.broadcast %cst_9 : f32 to vector<512x512xf32>
      %24 = arith.select %20, %22, %23 : vector<512x512xi1>, vector<512x512xf32>
      %c0_10 = arith.constant 0 : index
      %c0_11 = arith.constant 0 : index
      %25 = vector.load %arg5[%c0_10, %c0_11] : memref<1x512xf32, #tpu.memory_space<vmem>>, vector<1x512xf32>
      %cst_12 = arith.constant dense<0.000000e+00> : vector<512xf32>
      %26 = vector.multi_reduction <add>, %24, %cst_12 [0] : vector<512x512xf32> to vector<512xf32>
      %27 = vector.shape_cast %26 : vector<512xf32> to vector<1x512xf32>
      %28 = arith.addf %25, %27 : vector<1x512xf32>
      %c0_13 = arith.constant 0 : index
      %c0_14 = arith.constant 0 : index
      %29 = vector.load %arg5[%c0_13, %c0_14] : memref<1x512xf32, #tpu.memory_space<vmem>>, vector<1x512xf32>
      tpu.vector_store %arg5[%c0_13, %c0_14], %28 {strides = array<i32>} : memref<1x512xf32, #tpu.memory_space<vmem>>, vector<1x512xf32>,
    } else {
    }
    return
  }
  func.func @transform_0(%arg0: i32, %arg1: i32, %arg2: memref<1xi32, #tpu.memory_space<smem>>) -> (i32, i32) {
    %c0_i32 = arith.constant 0 : i32
    %c0_i32_0 = arith.constant 0 : i32
    return %arg0, %c0_i32 : i32, i32
  }
  func.func @transform_1(%arg0: i32, %arg1: i32, %arg2: memref<1xi32, #tpu.memory_space<smem>>) -> (i32, i32) {
    %c0_i32 = arith.constant 0 : i32
    %c0_i32_0 = arith.constant 0 : i32
    return %c0_i32, %arg1 : i32, i32
  }
  func.func @transform_2(%arg0: i32, %arg1: i32, %arg2: memref<1xi32, #tpu.memory_space<smem>>) -> (i32, i32) {
    %c0_i32 = arith.constant 0 : i32
    %c0_i32_0 = arith.constant 0 : i32
    return %c0_i32, %arg0 : i32, i32
  }
}

</mosaic_0001>

<llo_original>
// kernel: tpu_custom_call.1
$region0: #{tpu_custom_call.1}
  #allocation0 [shape = 'u32[]', space=smem, size = 0x4, offset = 0x4, fixed_abs, tag = 'smem constant byte address 0x4 - core index']
  #allocation1 [shape = 'u32[144,128]{1,0:T(1,128)}', space=vmem, size = 0x12000, scoped, tag = 'internal scratch']
  #allocation2 [shape = 's32[1]{0}', space=sflag, size = 0x4, scoped, tag = 'scoped memory for tpu_custom_call.1']
  #allocation3 [shape = 's32[1]{0:T(128)S(6)}', space=smem, size = 0x200, scoped, tag = 'prefetched SMEM operand 0']
  %s0 = inlined_call_operand.<no memory space> [shape: s32[1], index: 0, kind: input, shape index: {}]
  %s1 = inlined_call_operand.hbm [shape: f32[512,2], index: 1, kind: input, shape index: {}]
  %s2 = inlined_call_operand.hbm [shape: f32[2,512], index: 2, kind: input, shape index: {}]
  %s3 = inlined_call_operand.hbm [shape: f32[1,512], index: 3, kind: output, shape index: {}]
  %s4 = sld [smem:[#allocation0]]
  $region34: #{tpu_custom_call.1} parent=0
    _
  %s6 = ssub.s32 1, %s4
  %s7 = scalar_select 0, %s6, %s4
  %8 = sst [smem:[#allocation3]] %s0
  $region1: #{tpu_custom_call.1} parent=0
    #allocation4 [shape = 'u8[262144]{0}', space=vmem, size = 0x40000, scoped, tag = 'input window, operand 1, single buffered']
    #allocation5 [shape = 's32[1]{0}', space=sflag, size = 0x4, scoped, tag = 'scoped memory for tpu_custom_call.1']
    #allocation6 [shape = 's32[1]{0}', space=sflag, size = 0x4, scoped, tag = 'scoped memory for tpu_custom_call.1']
    #allocation7 [shape = 'u8[4096]{0}', space=vmem, size = 0x1000, scoped, tag = 'input window, operand 2, single buffered']
    #allocation8 [shape = 's32[1]{0}', space=sflag, size = 0x4, scoped, tag = 'scoped memory for tpu_custom_call.1']
    #allocation9 [shape = 'u8[2048]{0}', space=vmem, size = 0x800, scoped, tag = 'output window, operand 0, single buffered']
    %9 = vsyncpa [#allocation5], 0
    %10 = vsyncpa [#allocation8], 0
    %11 = vsyncpa [#allocation6], 0
    // Predicated region
    $region2: #{tpu_custom_call.1} parent=1 // pred_check
      _
    $region3: #{tpu_custom_call.1} parent=1 // pred_check_branch
      %13 = sbr.rel (0) target = $region5
    $region4: #{tpu_custom_call.1} parent=1 // pred_region
      %s15 = ssub.s32 8192, 8192
      %16 = vsyncadd [#allocation5], %s15
      %s17 = sshll.u32 [#allocation4], 4
      %s18 = int_to_ptr.vmem [resolvable:$true] %s17
      %23 = dma.hbm_to_vmem [thread:$0]  %s1, 8192, %s18, [#allocation5], 128, 128, 8
    $region5: #{tpu_custom_call.1} parent=1 // pred_fallthru
      _
    // Predicated region
    $region6: #{tpu_custom_call.1} parent=1 // pred_check
      _
    $region7: #{tpu_custom_call.1} parent=1 // pred_check_branch
      %25 = sbr.rel (0) target = $region9
    $region8: #{tpu_custom_call.1} parent=1 // pred_region
      %s27 = ssub.s32 128, 128
      %28 = vsyncadd [#allocation8], %s27
      %s30 = sshll.u32 [#allocation7], 4
      %s31 = int_to_ptr.vmem [resolvable:$true] %s30
      %33 = dma.hbm_to_vmem [thread:$0]  %s2, 128, %s31, [#allocation8]
    $region9: #{tpu_custom_call.1} parent=1 // pred_fallthru
      _
    // Predicated region
    $region10: #{tpu_custom_call.1} parent=1 // pred_check
      _
    $region11: #{tpu_custom_call.1} parent=1 // pred_check_branch
      %35 = sbr.rel (0) target = $region13
    $region12: #{tpu_custom_call.1} parent=1 // pred_region
      %36 = dma.done [#allocation5], 8192
    $region13: #{tpu_custom_call.1} parent=1 // pred_fallthru
      _
    // Predicated region
    $region14: #{tpu_custom_call.1} parent=1 // pred_check
      _
    $region15: #{tpu_custom_call.1} parent=1 // pred_check_branch
      %38 = sbr.rel (0) target = $region17
    $region16: #{tpu_custom_call.1} parent=1 // pred_region
      %39 = dma.done [#allocation8], 128
    $region17: #{tpu_custom_call.1} parent=1 // pred_fallthru
      _
    %p40 = scmp.eq.s32.totalorder 0, 0
    // Predicated region
    $region18: #{tpu_custom_call.1} parent=1 // pred_check
      %p41 = pneg %p40
    $region19: #{tpu_custom_call.1} parent=1 // pred_check_branch
      %43 = sbr.rel (%p41) target = $region21
    $region20: #{tpu_custom_call.1} parent=1 // pred_region
      %v44 = vlaneseq
      %vm45 = vcmp.ge.s32.totalorder %v44, 0
      %vm46 = vcmp.lt.s32.totalorder %v44, 512
      %vm47 = vmand %vm45, %vm46
      %48 = vst.msk [vmem:[#allocation9] sm:$0xf] %vm47, 0.0
    $region21: #{tpu_custom_call.1} parent=1 // pred_fallthru
      _
    %s49 = sadd.s32 0, 0
    %s50 = sld [smem:[#allocation3 + %s49]]
    %p51 = scmp.ne.s32.totalorder %s50, 0
    // Predicated region
    $region22: #{tpu_custom_call.1} parent=1 // pred_check
      %p52 = pneg %p51
    $region23: #{tpu_custom_call.1} parent=1 // pred_check_branch
      %54 = sbr.rel (%p52) target = $region25
    $region24: #{tpu_custom_call.1} parent=1 // pred_region
      %v55 = vld [vmem:[#allocation4] sm:$0xff]
      %v56 = vld [vmem:[#allocation4 + $0x8] sm:$0xff]
      %v57 = vld [vmem:[#allocation4 + $0x10] sm:$0xff]
      %v58 = vld [vmem:[#allocation4 + $0x18] sm:$0xff]
      %v59 = vld [vmem:[#allocation4 + $0x20] sm:$0xff]
      %v60 = vld [vmem:[#allocation4 + $0x28] sm:$0xff]
      %v61 = vld [vmem:[#allocation4 + $0x30] sm:$0xff]
      %v62 = vld [vmem:[#allocation4 + $0x38] sm:$0xff]
      %v63 = vld [vmem:[#allocation4 + $0x40] sm:$0xff]
      %v64 = vld [vmem:[#allocation4 + $0x48] sm:$0xff]
      %v65 = vld [vmem:[#allocation4 + $0x50] sm:$0xff]
      %v66 = vld [vmem:[#allocation4 + $0x58] sm:$0xff]
      %v67 = vld [vmem:[#allocation4 + $0x60] sm:$0xff]
      %v68 = vld [vmem:[#allocation4 + $0x68] sm:$0xff]
      %v69 = vld [vmem:[#allocation4 + $0x70] sm:$0xff]
      %v70 = vld [vmem:[#allocation4 + $0x78] sm:$0xff]
      %v71 = vld [vmem:[#allocation4 + $0x80] sm:$0xff]
      %v72 = vld [vmem:[#allocation4 + $0x88] sm:$0xff]
      %v73 = vld [vmem:[#allocation4 + $0x90] sm:$0xff]
      %v74 = vld [vmem:[#allocation4 + $0x98] sm:$0xff]
      %v75 = vld [vmem:[#allocation4 + $0xa0] sm:$0xff]
      %v76 = vld [vmem:[#allocation4 + $0xa8] sm:$0xff]
      %v77 = vld [vmem:[#allocation4 + $0xb0] sm:$0xff]
      %v78 = vld [vmem:[#allocation4 + $0xb8] sm:$0xff]
      %v79 = vld [vmem:[#allocation4 + $0xc0] sm:$0xff]
      %v80 = vld [vmem:[#allocation4 + $0xc8] sm:$0xff]
      %v81 = vld [vmem:[#allocation4 + $0xd0] sm:$0xff]
      %v82 = vld [vmem:[#allocation4 + $0xd8] sm:$0xff]
      %v83 = vld [vmem:[#allocation4 + $0xe0] sm:$0xff]
      %v84 = vld [vmem:[#allocation4 + $0xe8] sm:$0xff]
      %v85 = vld [vmem:[#allocation4 + $0xf0] sm:$0xff]
      %v86 = vld [vmem:[#allocation4 + $0xf8] sm:$0xff]
      %v87 = vld [vmem:[#allocation4 + $0x100] sm:$0xff]
      %v88 = vld [vmem:[#allocation4 + $0x108] sm:$0xff]
      %v89 = vld [vmem:[#allocation4 + $0x110] sm:$0xff]
      %v90 = vld [vmem:[#allocation4 + $0x118] sm:$0xff]
      %v91 = vld [vmem:[#allocation4 + $0x120] sm:$0xff]
      %v92 = vld [vmem:[#allocation4 + $0x128] sm:$0xff]
      %v93 = vld [vmem:[#allocation4 + $0x130] sm:$0xff]
      %v94 = vld [vmem:[#allocation4 + $0x138] sm:$0xff]
      %v95 = vld [vmem:[#allocation4 + $0x140] sm:$0xff]
      %v96 = vld [vmem:[#allocation4 + $0x148] sm:$0xff]
      %v97 = vld [vmem:[#allocation4 + $0x150] sm:$0xff]
      %v98 = vld [vmem:[#allocation4 + $0x158] sm:$0xff]
      %v99 = vld [vmem:[#allocation4 + $0x160] sm:$0xff]
      %v100 = vld [vmem:[#allocation4 + $0x168] sm:$0xff]
      %v101 = vld [vmem:[#allocation4 + $0x170] sm:$0xff]
      %v102 = vld [vmem:[#allocation4 + $0x178] sm:$0xff]
      %v103 = vld [vmem:[#allocation4 + $0x180] sm:$0xff]
      %v104 = vld [vmem:[#allocation4 + $0x188] sm:$0xff]
      %v105 = vld [vmem:[#allocation4 + $0x190] sm:$0xff]
      %v106 = vld [vmem:[#allocation4 + $0x198] sm:$0xff]
      %v107 = vld [vmem:[#allocation4 + $0x1a0] sm:$0xff]
      %v108 = vld [vmem:[#allocation4 + $0x1a8] sm:$0xff]
      %v109 = vld [vmem:[#allocation4 + $0x1b0] sm:$0xff]
      %v110 = vld [vmem:[#allocation4 + $0x1b8] sm:$0xff]
      %v111 = vld [vmem:[#allocation4 + $0x1c0] sm:$0xff]
      %v112 = vld [vmem:[#allocation4 + $0x1c8] sm:$0xff]
      %v113 = vld [vmem:[#allocation4 + $0x1d0] sm:$0xff]
      %v114 = vld [vmem:[#allocation4 + $0x1d8] sm:$0xff]
      %v115 = vld [vmem:[#allocation4 + $0x1e0] sm:$0xff]
      %v116 = vld [vmem:[#allocation4 + $0x1e8] sm:$0xff]
      %v117 = vld [vmem:[#allocation4 + $0x1f0] sm:$0xff]
      %v118 = vld [vmem:[#allocation4 + $0x1f8] sm:$0xff]
      %v119 = vld [vmem:[#allocation7] ss:$2 sm:$0xf]
      %s120 = scalar_lea.vmem [#allocation7], 1
      %v121 = vld [vmem:[%s120] ss:$2 sm:$0xf]
      %123 = vset.pattern.permute.xlu0 0
      %124 = vperm.xlu0 %123, %v55
      %v125 = vpop.permute.xlu0 %124
      %128 = vset.pattern.permute.xlu0 0
      %129 = vperm.xlu0 %128, %v56
      %v130 = vpop.permute.xlu0 %129
      %133 = vset.pattern.permute.xlu0 0
      %134 = vperm.xlu0 %133, %v57
      %v135 = vpop.permute.xlu0 %134
      %138 = vset.pattern.permute.xlu0 0
      %139 = vperm.xlu0 %138, %v58
      %v140 = vpop.permute.xlu0 %139
      %143 = vset.pattern.permute.xlu0 0
      %144 = vperm.xlu0 %143, %v59
      %v145 = vpop.permute.xlu0 %144
      %148 = vset.pattern.permute.xlu0 0
      %149 = vperm.xlu0 %148, %v60
      %v150 = vpop.permute.xlu0 %149
      %153 = vset.pattern.permute.xlu0 0
      %154 = vperm.xlu0 %153, %v61
      %v155 = vpop.permute.xlu0 %154
      %158 = vset.pattern.permute.xlu0 0
      %159 = vperm.xlu0 %158, %v62
      %v160 = vpop.permute.xlu0 %159
      %163 = vset.pattern.permute.xlu0 0
      %164 = vperm.xlu0 %163, %v63
      %v165 = vpop.permute.xlu0 %164
      %168 = vset.pattern.permute.xlu0 0
      %169 = vperm.xlu0 %168, %v64
      %v170 = vpop.permute.xlu0 %169
      %173 = vset.pattern.permute.xlu0 0
      %174 = vperm.xlu0 %173, %v65
      %v175 = vpop.permute.xlu0 %174
      %178 = vset.pattern.permute.xlu0 0
      %179 = vperm.xlu0 %178, %v66
      %v180 = vpop.permute.xlu0 %179
      %183 = vset.pattern.permute.xlu0 0
      %184 = vperm.xlu0 %183, %v67
      %v185 = vpop.permute.xlu0 %184
      %188 = vset.pattern.permute.xlu0 0
      %189 = vperm.xlu0 %188, %v68
      %v190 = vpop.permute.xlu0 %189
      %193 = vset.pattern.permute.xlu0 0
      %194 = vperm.xlu0 %193, %v69
      %v195 = vpop.permute.xlu0 %194
      %198 = vset.pattern.permute.xlu0 0
      %199 = vperm.xlu0 %198, %v70
      %v200 = vpop.permute.xlu0 %199
      %203 = vset.pattern.permute.xlu0 0
      %204 = vperm.xlu0 %203, %v71
      %v205 = vpop.permute.xlu0 %204
      %208 = vset.pattern.permute.xlu0 0
      %209 = vperm.xlu0 %208, %v72
      %v210 = vpop.permute.xlu0 %209
      %213 = vset.pattern.permute.xlu0 0
      %214 = vperm.xlu0 %213, %v73
      %v215 = vpop.permute.xlu0 %214
      %218 = vset.pattern.permute.xlu0 0
      %219 = vperm.xlu0 %218, %v74
      %v220 = vpop.permute.xlu0 %219
      %223 = vset.pattern.permute.xlu0 0
      %224 = vperm.xlu0 %223, %v75
      %v225 = vpop.permute.xlu0 %224
      %228 = vset.pattern.permute.xlu0 0
      %229 = vperm.xlu0 %228, %v76
      %v230 = vpop.permute.xlu0 %229
      %233 = vset.pattern.permute.xlu0 0
      %234 = vperm.xlu0 %233, %v77
      %v235 = vpop.permute.xlu0 %234
      %238 = vset.pattern.permute.xlu0 0
      %239 = vperm.xlu0 %238, %v78
      %v240 = vpop.permute.xlu0 %239
      %243 = vset.pattern.permute.xlu0 0
      %244 = vperm.xlu0 %243, %v79
      %v245 = vpop.permute.xlu0 %244
      %248 = vset.pattern.permute.xlu0 0
      %249 = vperm.xlu0 %248, %v80
      %v250 = vpop.permute.xlu0 %249
      %253 = vset.pattern.permute.xlu0 0
      %254 = vperm.xlu0 %253, %v81
      %v255 = vpop.permute.xlu0 %254
      %258 = vset.pattern.permute.xlu0 0
      %259 = vperm.xlu0 %258, %v82
      %v260 = vpop.permute.xlu0 %259
      %263 = vset.pattern.permute.xlu0 0
      %264 = vperm.xlu0 %263, %v83
      %v265 = vpop.permute.xlu0 %264
      %268 = vset.pattern.permute.xlu0 0
      %269 = vperm.xlu0 %268, %v84
      %v270 = vpop.permute.xlu0 %269
      %273 = vset.pattern.permute.xlu0 0
      %274 = vperm.xlu0 %273, %v85
      %v275 = vpop.permute.xlu0 %274
      %278 = vset.pattern.permute.xlu0 0
      %279 = vperm.xlu0 %278, %v86
      %v280 = vpop.permute.xlu0 %279
      %283 = vset.pattern.permute.xlu0 0
      %284 = vperm.xlu0 %283, %v87
      %v285 = vpop.permute.xlu0 %284
      %288 = vset.pattern.permute.xlu0 0
      %289 = vperm.xlu0 %288, %v88
      %v290 = vpop.permute.xlu0 %289
      %293 = vset.pattern.permute.xlu0 0
      %294 = vperm.xlu0 %293, %v89
      %v295 = vpop.permute.xlu0 %294
      %298 = vset.pattern.permute.xlu0 0
      %299 = vperm.xlu0 %298, %v90
      %v300 = vpop.permute.xlu0 %299
      %303 = vset.pattern.permute.xlu0 0
      %304 = vperm.xlu0 %303, %v91
      %v305 = vpop.permute.xlu0 %304
      %308 = vset.pattern.permute.xlu0 0
      %309 = vperm.xlu0 %308, %v92
      %v310 = vpop.permute.xlu0 %309
      %313 = vset.pattern.permute.xlu0 0
      %314 = vperm.xlu0 %313, %v93
      %v315 = vpop.permute.xlu0 %314
      %318 = vset.pattern.permute.xlu0 0
      %319 = vperm.xlu0 %318, %v94
      %v320 = vpop.permute.xlu0 %319
      %323 = vset.pattern.permute.xlu0 0
      %324 = vperm.xlu0 %323, %v95
      %v325 = vpop.permute.xlu0 %324
      %328 = vset.pattern.permute.xlu0 0
      %329 = vperm.xlu0 %328, %v96
      %v330 = vpop.permute.xlu0 %329
      %333 = vset.pattern.permute.xlu0 0
      %334 = vperm.xlu0 %333, %v97
      %v335 = vpop.permute.xlu0 %334
      %338 = vset.pattern.permute.xlu0 0
      %339 = vperm.xlu0 %338, %v98
      %v340 = vpop.permute.xlu0 %339
      %343 = vset.pattern.permute.xlu0 0
      %344 = vperm.xlu0 %343, %v99
      %v345 = vpop.permute.xlu0 %344
      %348 = vset.pattern.permute.xlu0 0
      %349 = vperm.xlu0 %348, %v100
      %v350 = vpop.permute.xlu0 %349
      %353 = vset.pattern.permute.xlu0 0
      %354 = vperm.xlu0 %353, %v101
      %v355 = vpop.permute.xlu0 %354
      %358 = vset.pattern.permute.xlu0 0
      %359 = vperm.xlu0 %358, %v102
      %v360 = vpop.permute.xlu0 %359
      %363 = vset.pattern.permute.xlu0 0
      %364 = vperm.xlu0 %363, %v103
      %v365 = vpop.permute.xlu0 %364
      %368 = vset.pattern.permute.xlu0 0
      %369 = vperm.xlu0 %368, %v104
      %v370 = vpop.permute.xlu0 %369
      %373 = vset.pattern.permute.xlu0 0
      %374 = vperm.xlu0 %373, %v105
      %v375 = vpop.permute.xlu0 %374
      %378 = vset.pattern.permute.xlu0 0
      %379 = vperm.xlu0 %378, %v106
      %v380 = vpop.permute.xlu0 %379
      %383 = vset.pattern.permute.xlu0 0
      %384 = vperm.xlu0 %383, %v107
      %v385 = vpop.permute.xlu0 %384
      %388 = vset.pattern.permute.xlu0 0
      %389 = vperm.xlu0 %388, %v108
      %v390 = vpop.permute.xlu0 %389
      %393 = vset.pattern.permute.xlu0 0
      %394 = vperm.xlu0 %393, %v109
      %v395 = vpop.permute.xlu0 %394
      %398 = vset.pattern.permute.xlu0 0
      %399 = vperm.xlu0 %398, %v110
      %v400 = vpop.permute.xlu0 %399
      %403 = vset.pattern.permute.xlu0 0
      %404 = vperm.xlu0 %403, %v111
      %v405 = vpop.permute.xlu0 %404
      %408 = vset.pattern.permute.xlu0 0
      %409 = vperm.xlu0 %408, %v112
      %v410 = vpop.permute.xlu0 %409
      %413 = vset.pattern.permute.xlu0 0
      %414 = vperm.xlu0 %413, %v113
      %v415 = vpop.permute.xlu0 %414
      %418 = vset.pattern.permute.xlu0 0
      %419 = vperm.xlu0 %418, %v114
      %v420 = vpop.permute.xlu0 %419
      %423 = vset.pattern.permute.xlu0 0
      %424 = vperm.xlu0 %423, %v115
      %v425 = vpop.permute.xlu0 %424
      %428 = vset.pattern.permute.xlu0 0
      %429 = vperm.xlu0 %428, %v116
      %v430 = vpop.permute.xlu0 %429
      %433 = vset.pattern.permute.xlu0 0
      %434 = vperm.xlu0 %433, %v117
      %v435 = vpop.permute.xlu0 %434
      %438 = vset.pattern.permute.xlu0 0
      %439 = vperm.xlu0 %438, %v118
      %v440 = vpop.permute.xlu0 %439
      %v443 = vlaneseq
      %v444 = vshrl.u32 %v443, 7
      %v445 = vsub.s32 0, %v444
      %v446 = vrot.slane %v119, %v445
      %v447 = vlaneseq
      %v448 = vshrl.u32 %v447, 7
      %v449 = vsub.s32 1, %v448
      %v450 = vrot.slane %v119, %v449
      %v451 = vlaneseq
      %v452 = vshrl.u32 %v451, 7
      %v453 = vsub.s32 2, %v452
      %v454 = vrot.slane %v119, %v453
      %v455 = vlaneseq
      %v456 = vshrl.u32 %v455, 7
      %v457 = vsub.s32 3, %v456
      %v458 = vrot.slane %v119, %v457
      %v463 = vsub.f32 %v125, %v446
      %v464 = vsub.f32 %v125, %v450
      %v465 = vsub.f32 %v125, %v454
      %v466 = vsub.f32 %v125, %v458
      %v467 = vsub.f32 %v130, %v446
      %v468 = vsub.f32 %v130, %v450
      %v469 = vsub.f32 %v130, %v454
      %v470 = vsub.f32 %v130, %v458
      %v471 = vsub.f32 %v135, %v446
      %v472 = vsub.f32 %v135, %v450
      %v473 = vsub.f32 %v135, %v454
      %v474 = vsub.f32 %v135, %v458
      %v475 = vsub.f32 %v140, %v446
      %v476 = vsub.f32 %v140, %v450
      %v477 = vsub.f32 %v140, %v454
      %v478 = vsub.f32 %v140, %v458
      %v479 = vsub.f32 %v145, %v446
      %v480 = vsub.f32 %v145, %v450
      %v481 = vsub.f32 %v145, %v454
      %v482 = vsub.f32 %v145, %v458
      %v483 = vsub.f32 %v150, %v446
      %v484 = vsub.f32 %v150, %v450
      %v485 = vsub.f32 %v150, %v454
      %v486 = vsub.f32 %v150, %v458
      %v487 = vsub.f32 %v155, %v446
      %v488 = vsub.f32 %v155, %v450
      %v489 = vsub.f32 %v155, %v454
      %v490 = vsub.f32 %v155, %v458
      %v491 = vsub.f32 %v160, %v446
      %v492 = vsub.f32 %v160, %v450
      %v493 = vsub.f32 %v160, %v454
      %v494 = vsub.f32 %v160, %v458
      %v495 = vsub.f32 %v165, %v446
      %v496 = vsub.f32 %v165, %v450
      %v497 = vsub.f32 %v165, %v454
      %v498 = vsub.f32 %v165, %v458
      %v499 = vsub.f32 %v170, %v446
      %v500 = vsub.f32 %v170, %v450
      %v501 = vsub.f32 %v170, %v454
      %v502 = vsub.f32 %v170, %v458
      %v503 = vsub.f32 %v175, %v446
      %v504 = vsub.f32 %v175, %v450
      %v505 = vsub.f32 %v175, %v454
      %v506 = vsub.f32 %v175, %v458
      %v507 = vsub.f32 %v180, %v446
      %v508 = vsub.f32 %v180, %v450
      %v509 = vsub.f32 %v180, %v454
      %v510 = vsub.f32 %v180, %v458
      %v511 = vsub.f32 %v185, %v446
      %v512 = vsub.f32 %v185, %v450
      %v513 = vsub.f32 %v185, %v454
      %v514 = vsub.f32 %v185, %v458
      %v515 = vsub.f32 %v190, %v446
      %v516 = vsub.f32 %v190, %v450
      %v517 = vsub.f32 %v190, %v454
      %v518 = vsub.f32 %v190, %v458
      %v519 = vsub.f32 %v195, %v446
      %v520 = vsub.f32 %v195, %v450
      %v521 = vsub.f32 %v195, %v454
      %v522 = vsub.f32 %v195, %v458
      %v523 = vsub.f32 %v200, %v446
      %v524 = vsub.f32 %v200, %v450
      %v525 = vsub.f32 %v200, %v454
      %v526 = vsub.f32 %v200, %v458
      %v527 = vsub.f32 %v205, %v446
      %v528 = vsub.f32 %v205, %v450
      %v529 = vsub.f32 %v205, %v454
      %v530 = vsub.f32 %v205, %v458
      %v531 = vsub.f32 %v210, %v446
      %v532 = vsub.f32 %v210, %v450
      %v533 = vsub.f32 %v210, %v454
      %v534 = vsub.f32 %v210, %v458
      %v535 = vsub.f32 %v215, %v446
      %v536 = vsub.f32 %v215, %v450
      %v537 = vsub.f32 %v215, %v454
      %v538 = vsub.f32 %v215, %v458
      %v539 = vsub.f32 %v220, %v446
      %v540 = vsub.f32 %v220, %v450
      %v541 = vsub.f32 %v220, %v454
      %v542 = vsub.f32 %v220, %v458
      %v543 = vsub.f32 %v225, %v446
      %v544 = vsub.f32 %v225, %v450
      %v545 = vsub.f32 %v225, %v454
      %v546 = vsub.f32 %v225, %v458
      %v547 = vsub.f32 %v230, %v446
      %v548 = vsub.f32 %v230, %v450
      %v549 = vsub.f32 %v230, %v454
      %v550 = vsub.f32 %v230, %v458
      %v551 = vsub.f32 %v235, %v446
      %v552 = vsub.f32 %v235, %v450
      %v553 = vsub.f32 %v235, %v454
      %v554 = vsub.f32 %v235, %v458
      %v555 = vsub.f32 %v240, %v446
      %v556 = vsub.f32 %v240, %v450
      %v557 = vsub.f32 %v240, %v454
      %v558 = vsub.f32 %v240, %v458
      %v559 = vsub.f32 %v245, %v446
      %v560 = vsub.f32 %v245, %v450
      %v561 = vsub.f32 %v245, %v454
      %v562 = vsub.f32 %v245, %v458
      %v563 = vsub.f32 %v250, %v446
      %v564 = vsub.f32 %v250, %v450
      %v565 = vsub.f32 %v250, %v454
      %v566 = vsub.f32 %v250, %v458
      %v567 = vsub.f32 %v255, %v446
      %v568 = vsub.f32 %v255, %v450
      %v569 = vsub.f32 %v255, %v454
      %v570 = vsub.f32 %v255, %v458
      %v571 = vsub.f32 %v260, %v446
      %v572 = vsub.f32 %v260, %v450
      %v573 = vsub.f32 %v260, %v454
      %v574 = vsub.f32 %v260, %v458
      %v575 = vsub.f32 %v265, %v446
      %v576 = vsub.f32 %v265, %v450
      %v577 = vsub.f32 %v265, %v454
      %v578 = vsub.f32 %v265, %v458
      %v579 = vsub.f32 %v270, %v446
      %v580 = vsub.f32 %v270, %v450
      %v581 = vsub.f32 %v270, %v454
      %v582 = vsub.f32 %v270, %v458
      %v583 = vsub.f32 %v275, %v446
      %v584 = vsub.f32 %v275, %v450
      %v585 = vsub.f32 %v275, %v454
      %v586 = vsub.f32 %v275, %v458
      %v587 = vsub.f32 %v280, %v446
      %v588 = vsub.f32 %v280, %v450
      %v589 = vsub.f32 %v280, %v454
      %v590 = vsub.f32 %v280, %v458
      %v591 = vsub.f32 %v285, %v446
      %v592 = vsub.f32 %v285, %v450
      %v593 = vsub.f32 %v285, %v454
      %v594 = vsub.f32 %v285, %v458
      %v595 = vsub.f32 %v290, %v446
      %v596 = vsub.f32 %v290, %v450
      %v597 = vsub.f32 %v290, %v454
      %v598 = vsub.f32 %v290, %v458
      %v599 = vsub.f32 %v295, %v446
      %v600 = vsub.f32 %v295, %v450
      %v601 = vsub.f32 %v295, %v454
      %v602 = vsub.f32 %v295, %v458
      %v603 = vsub.f32 %v300, %v446
      %v604 = vsub.f32 %v300, %v450
      %v605 = vsub.f32 %v300, %v454
      %v606 = vsub.f32 %v300, %v458
      %v607 = vsub.f32 %v305, %v446
      %v608 = vsub.f32 %v305, %v450
      %v609 = vsub.f32 %v305, %v454
      %v610 = vsub.f32 %v305, %v458
      %v611 = vsub.f32 %v310, %v446
      %v612 = vsub.f32 %v310, %v450
      %v613 = vsub.f32 %v310, %v454
      %v614 = vsub.f32 %v310, %v458
      %v615 = vsub.f32 %v315, %v446
      %v616 = vsub.f32 %v315, %v450
      %v617 = vsub.f32 %v315, %v454
      %v618 = vsub.f32 %v315, %v458
      %v619 = vsub.f32 %v320, %v446
      %v620 = vsub.f32 %v320, %v450
      %v621 = vsub.f32 %v320, %v454
      %v622 = vsub.f32 %v320, %v458
      %v623 = vsub.f32 %v325, %v446
      %v624 = vsub.f32 %v325, %v450
      %v625 = vsub.f32 %v325, %v454
      %v626 = vsub.f32 %v325, %v458
      %v627 = vsub.f32 %v330, %v446
      %v628 = vsub.f32 %v330, %v450
      %v629 = vsub.f32 %v330, %v454
      %v630 = vsub.f32 %v330, %v458
      %v631 = vsub.f32 %v335, %v446
      %v632 = vsub.f32 %v335, %v450
      %v633 = vsub.f32 %v335, %v454
      %v634 = vsub.f32 %v335, %v458
      %v635 = vsub.f32 %v340, %v446
      %v636 = vsub.f32 %v340, %v450
      %v637 = vsub.f32 %v340, %v454
      %v638 = vsub.f32 %v340, %v458
      %v639 = vsub.f32 %v345, %v446
      %v640 = vsub.f32 %v345, %v450
      %v641 = vsub.f32 %v345, %v454
      %v642 = vsub.f32 %v345, %v458
      %v643 = vsub.f32 %v350, %v446
      %v644 = vsub.f32 %v350, %v450
      %v645 = vsub.f32 %v350, %v454
      %v646 = vsub.f32 %v350, %v458
      %v647 = vsub.f32 %v355, %v446
      %v648 = vsub.f32 %v355, %v450
      %v649 = vsub.f32 %v355, %v454
      %v650 = vsub.f32 %v355, %v458
      %v651 = vsub.f32 %v360, %v446
      %v652 = vsub.f32 %v360, %v450
      %v653 = vsub.f32 %v360, %v454
      %v654 = vsub.f32 %v360, %v458
      %v655 = vsub.f32 %v365, %v446
      %v656 = vsub.f32 %v365, %v450
      %v657 = vsub.f32 %v365, %v454
      %v658 = vsub.f32 %v365, %v458
      %v659 = vsub.f32 %v370, %v446
      %v660 = vsub.f32 %v370, %v450
      %v661 = vsub.f32 %v370, %v454
      %v662 = vsub.f32 %v370, %v458
      %v663 = vsub.f32 %v375, %v446
      %v664 = vsub.f32 %v375, %v450
      %v665 = vsub.f32 %v375, %v454
      %v666 = vsub.f32 %v375, %v458
      %v667 = vsub.f32 %v380, %v446
      %v668 = vsub.f32 %v380, %v450
      %v669 = vsub.f32 %v380, %v454
      %v670 = vsub.f32 %v380, %v458
      %v671 = vsub.f32 %v385, %v446
      %v672 = vsub.f32 %v385, %v450
      %v673 = vsub.f32 %v385, %v454
      %v674 = vsub.f32 %v385, %v458
      %v675 = vsub.f32 %v390, %v446
      %v676 = vsub.f32 %v390, %v450
      %v677 = vsub.f32 %v390, %v454
      %v678 = vsub.f32 %v390, %v458
      %v679 = vsub.f32 %v395, %v446
      %v680 = vsub.f32 %v395, %v450
      %v681 = vsub.f32 %v395, %v454
      %v682 = vsub.f32 %v395, %v458
      %v683 = vsub.f32 %v400, %v446
      %v684 = vsub.f32 %v400, %v450
      %v685 = vsub.f32 %v400, %v454
      %v686 = vsub.f32 %v400, %v458
      %v687 = vsub.f32 %v405, %v446
      %v688 = vsub.f32 %v405, %v450
      %v689 = vsub.f32 %v405, %v454
      %v690 = vsub.f32 %v405, %v458
      %v691 = vsub.f32 %v410, %v446
      %v692 = vsub.f32 %v410, %v450
      %v693 = vsub.f32 %v410, %v454
      %v694 = vsub.f32 %v410, %v458
      %v695 = vsub.f32 %v415, %v446
      %v696 = vsub.f32 %v415, %v450
      %v697 = vsub.f32 %v415, %v454
      %v698 = vsub.f32 %v415, %v458
      %v699 = vsub.f32 %v420, %v446
      %v700 = vsub.f32 %v420, %v450
      %v701 = vsub.f32 %v420, %v454
      %v702 = vsub.f32 %v420, %v458
      %v703 = vsub.f32 %v425, %v446
      %v704 = vsub.f32 %v425, %v450
      %v705 = vsub.f32 %v425, %v454
      %v706 = vsub.f32 %v425, %v458
      %v707 = vsub.f32 %v430, %v446
      %v708 = vsub.f32 %v430, %v450
      %v709 = vsub.f32 %v430, %v454
      %v710 = vsub.f32 %v430, %v458
      %v711 = vsub.f32 %v435, %v446
      %v712 = vsub.f32 %v435, %v450
      %v713 = vsub.f32 %v435, %v454
      %v714 = vsub.f32 %v435, %v458
      %v715 = vsub.f32 %v440, %v446
      %v716 = vsub.f32 %v440, %v450
      %v717 = vsub.f32 %v440, %v454
      %v718 = vsub.f32 %v440, %v458
      %v719 = vtanh.pop %v463
      %v720 = vtanh.pop %v464
      %v721 = vtanh.pop %v465
      %v722 = vtanh.pop %v466
      %v723 = vtanh.pop %v467
      %v724 = vtanh.pop %v468
      %v725 = vtanh.pop %v469
      %v726 = vtanh.pop %v470
      %v727 = vtanh.pop %v471
      %v728 = vtanh.pop %v472
      %v729 = vtanh.pop %v473
      %v730 = vtanh.pop %v474
      %v731 = vtanh.pop %v475
      %v732 = vtanh.pop %v476
      %v733 = vtanh.pop %v477
      %v734 = vtanh.pop %v478
      %v735 = vtanh.pop %v479
      %v736 = vtanh.pop %v480
      %v737 = vtanh.pop %v481
      %v738 = vtanh.pop %v482
      %v739 = vtanh.pop %v483
      %v740 = vtanh.pop %v484
      %v741 = vtanh.pop %v485
      %v742 = vtanh.pop %v486
      %v743 = vtanh.pop %v487
      %v744 = vtanh.pop %v488
      %v745 = vtanh.pop %v489
      %v746 = vtanh.pop %v490
      %v747 = vtanh.pop %v491
      %v748 = vtanh.pop %v492
      %v749 = vtanh.pop %v493
      %v750 = vtanh.pop %v494
      %v751 = vtanh.pop %v495
      %v752 = vtanh.pop %v496
      %v753 = vtanh.pop %v497
      %v754 = vtanh.pop %v498
      %v755 = vtanh.pop %v499
      %v756 = vtanh.pop %v500
      %v757 = vtanh.pop %v501
      %v758 = vtanh.pop %v502
      %v759 = vtanh.pop %v503
      %v760 = vtanh.pop %v504
      %v761 = vtanh.pop %v505
      %v762 = vtanh.pop %v506
      %v763 = vtanh.pop %v507
      %v764 = vtanh.pop %v508
      %v765 = vtanh.pop %v509
      %v766 = vtanh.pop %v510
      %v767 = vtanh.pop %v511
      %v768 = vtanh.pop %v512
      %v769 = vtanh.pop %v513
      %v770 = vtanh.pop %v514
      %v771 = vtanh.pop %v515
      %v772 = vtanh.pop %v516
      %v773 = vtanh.pop %v517
      %v774 = vtanh.pop %v518
      %v775 = vtanh.pop %v519
      %v776 = vtanh.pop %v520
      %v777 = vtanh.pop %v521
      %v778 = vtanh.pop %v522
      %v779 = vtanh.pop %v523
      %v780 = vtanh.pop %v524
      %v781 = vtanh.pop %v525
      %v782 = vtanh.pop %v526
      %v783 = vtanh.pop %v527
      %v784 = vtanh.pop %v528
      %v785 = vtanh.pop %v529
      %v786 = vtanh.pop %v530
      %v787 = vtanh.pop %v531
      %v788 = vtanh.pop %v532
      %v789 = vtanh.pop %v533
      %v790 = vtanh.pop %v534
      %v791 = vtanh.pop %v535
      %v792 = vtanh.pop %v536
      %v793 = vtanh.pop %v537
      %v794 = vtanh.pop %v538
      %v795 = vtanh.pop %v539
      %v796 = vtanh.pop %v540
      %v797 = vtanh.pop %v541
      %v798 = vtanh.pop %v542
      %v799 = vtanh.pop %v543
      %v800 = vtanh.pop %v544
      %v801 = vtanh.pop %v545
      %v802 = vtanh.pop %v546
      %v803 = vtanh.pop %v547
      %v804 = vtanh.pop %v548
      %v805 = vtanh.pop %v549
      %v806 = vtanh.pop %v550
      %v807 = vtanh.pop %v551
      %v808 = vtanh.pop %v552
      %v809 = vtanh.pop %v553
      %v810 = vtanh.pop %v554
      %v811 = vtanh.pop %v555
      %v812 = vtanh.pop %v556
      %v813 = vtanh.pop %v557
      %v814 = vtanh.pop %v558
      %v815 = vtanh.pop %v559
      %v816 = vtanh.pop %v560
      %v817 = vtanh.pop %v561
      %v818 = vtanh.pop %v562
      %v819 = vtanh.pop %v563
      %v820 = vtanh.pop %v564
      %v821 = vtanh.pop %v565
      %v822 = vtanh.pop %v566
      %v823 = vtanh.pop %v567
      %v824 = vtanh.pop %v568
      %v825 = vtanh.pop %v569
      %v826 = vtanh.pop %v570
      %v827 = vtanh.pop %v571
      %v828 = vtanh.pop %v572
      %v829 = vtanh.pop %v573
      %v830 = vtanh.pop %v574
      %v831 = vtanh.pop %v575
      %v832 = vtanh.pop %v576
      %v833 = vtanh.pop %v577
      %v834 = vtanh.pop %v578
      %v835 = vtanh.pop %v579
      %v836 = vtanh.pop %v580
      %v837 = vtanh.pop %v581
      %v838 = vtanh.pop %v582
      %v839 = vtanh.pop %v583
      %v840 = vtanh.pop %v584
      %v841 = vtanh.pop %v585
      %v842 = vtanh.pop %v586
      %v843 = vtanh.pop %v587
      %v844 = vtanh.pop %v588
      %v845 = vtanh.pop %v589
      %v846 = vtanh.pop %v590
      %v847 = vtanh.pop %v591
      %v848 = vtanh.pop %v592
      %v849 = vtanh.pop %v593
      %v850 = vtanh.pop %v594
      %v851 = vtanh.pop %v595
      %v852 = vtanh.pop %v596
      %v853 = vtanh.pop %v597
      %v854 = vtanh.pop %v598
      %v855 = vtanh.pop %v599
      %v856 = vtanh.pop %v600
      %v857 = vtanh.pop %v601
      %v858 = vtanh.pop %v602
      %v859 = vtanh.pop %v603
      %v860 = vtanh.pop %v604
      %v861 = vtanh.pop %v605
      %v862 = vtanh.pop %v606
      %v863 = vtanh.pop %v607
      %v864 = vtanh.pop %v608
      %v865 = vtanh.pop %v609
      %v866 = vtanh.pop %v610
      %v867 = vtanh.pop %v611
      %v868 = vtanh.pop %v612
      %v869 = vtanh.pop %v613
      %v870 = vtanh.pop %v614
      %v871 = vtanh.pop %v615
      %v872 = vtanh.pop %v616
      %v873 = vtanh.pop %v617
      %v874 = vtanh.pop %v618
      %v875 = vtanh.pop %v619
      %v876 = vtanh.pop %v620
      %v877 = vtanh.pop %v621
      %v878 = vtanh.pop %v622
      %v879 = vtanh.pop %v623
      %v880 = vtanh.pop %v624
      %v881 = vtanh.pop %v625
      %v882 = vtanh.pop %v626
      %v883 = vtanh.pop %v627
      %v884 = vtanh.pop %v628
      %v885 = vtanh.pop %v629
      %v886 = vtanh.pop %v630
      %v887 = vtanh.pop %v631
      %v888 = vtanh.pop %v632
      %v889 = vtanh.pop %v633
      %v890 = vtanh.pop %v634
      %v891 = vtanh.pop %v635
      %v892 = vtanh.pop %v636
      %v893 = vtanh.pop %v637
      %v894 = vtanh.pop %v638
      %v895 = vtanh.pop %v639
      %v896 = vtanh.pop %v640
      %v897 = vtanh.pop %v641
      %v898 = vtanh.pop %v642
      %v899 = vtanh.pop %v643
      %v900 = vtanh.pop %v644
      %v901 = vtanh.pop %v645
      %v902 = vtanh.pop %v646
      %v903 = vtanh.pop %v647
      %v904 = vtanh.pop %v648
      %v905 = vtanh.pop %v649
      %v906 = vtanh.pop %v650
      %v907 = vtanh.pop %v651
      %v908 = vtanh.pop %v652
      %v909 = vtanh.pop %v653
      %v910 = vtanh.pop %v654
      %v911 = vtanh.pop %v655
      %v912 = vtanh.pop %v656
      %v913 = vtanh.pop %v657
      %v914 = vtanh.pop %v658
      %v915 = vtanh.pop %v659
      %v916 = vtanh.pop %v660
      %v917 = vtanh.pop %v661
      %v918 = vtanh.pop %v662
      %v919 = vtanh.pop %v663
      %v920 = vtanh.pop %v664
      %v921 = vtanh.pop %v665
      %v922 = vtanh.pop %v666
      %v923 = vtanh.pop %v667
      %v924 = vtanh.pop %v668
      %v925 = vtanh.pop %v669
      %v926 = vtanh.pop %v670
      %v927 = vtanh.pop %v671
      %v928 = vtanh.pop %v672
      %v929 = vtanh.pop %v673
      %v930 = vtanh.pop %v674
      %v931 = vtanh.pop %v675
      %v932 = vtanh.pop %v676
      %v933 = vtanh.pop %v677
      %v934 = vtanh.pop %v678
      %v935 = vtanh.pop %v679
      %v936 = vtanh.pop %v680
      %v937 = vtanh.pop %v681
      %v938 = vtanh.pop %v682
      %v939 = vtanh.pop %v683
      %v940 = vtanh.pop %v684
      %v941 = vtanh.pop %v685
      %v942 = vtanh.pop %v686
      %v943 = vtanh.pop %v687
      %v944 = vtanh.pop %v688
      %v945 = vtanh.pop %v689
      %v946 = vtanh.pop %v690
      %v947 = vtanh.pop %v691
      %v948 = vtanh.pop %v692
      %v949 = vtanh.pop %v693
      %v950 = vtanh.pop %v694
      %v951 = vtanh.pop %v695
      %v952 = vtanh.pop %v696
      %v953 = vtanh.pop %v697
      %v954 = vtanh.pop %v698
      %v955 = vtanh.pop %v699
      %v956 = vtanh.pop %v700
      %v957 = vtanh.pop %v701
      %v958 = vtanh.pop %v702
      %v959 = vtanh.pop %v703
      %v960 = vtanh.pop %v704
      %v961 = vtanh.pop %v705
      %v962 = vtanh.pop %v706
      %v963 = vtanh.pop %v707
      %v964 = vtanh.pop %v708
      %v965 = vtanh.pop %v709
      %v966 = vtanh.pop %v710
      %v967 = vtanh.pop %v711
      %v968 = vtanh.pop %v712
      %v969 = vtanh.pop %v713
      %v970 = vtanh.pop %v714
      %v971 = vtanh.pop %v715
      %v972 = vtanh.pop %v716
      %v973 = vtanh.pop %v717
      %v974 = vtanh.pop %v718
      %v976 = vlaneseq
      %v977 = vshrl.u32 %v976, 7
      %v978 = vsub.s32 0, %v977
      %v979 = vrot.slane %v121, %v978
      %v980 = vlaneseq
      %v981 = vshrl.u32 %v980, 7
      %v982 = vsub.s32 1, %v981
      %v983 = vrot.slane %v121, %v982
      %v984 = vlaneseq
      %v985 = vshrl.u32 %v984, 7
      %v986 = vsub.s32 2, %v985
      %v987 = vrot.slane %v121, %v986
      %v988 = vlaneseq
      %v989 = vshrl.u32 %v988, 7
      %v990 = vsub.s32 3, %v989
      %v991 = vrot.slane %v121, %v990
      %996 = vset.pattern.permute.xlu0 1
      %997 = vperm.xlu0 %996, %v55
      %v998 = vpop.permute.xlu0 %997
      %1000 = vset.pattern.permute.xlu0 1
      %1001 = vperm.xlu0 %1000, %v56
      %v1002 = vpop.permute.xlu0 %1001
      %1004 = vset.pattern.permute.xlu0 1
      %1005 = vperm.xlu0 %1004, %v57
      %v1006 = vpop.permute.xlu0 %1005
      %1008 = vset.pattern.permute.xlu0 1
      %1009 = vperm.xlu0 %1008, %v58
      %v1010 = vpop.permute.xlu0 %1009
      %1012 = vset.pattern.permute.xlu0 1
      %1013 = vperm.xlu0 %1012, %v59
      %v1014 = vpop.permute.xlu0 %1013
      %1016 = vset.pattern.permute.xlu0 1
      %1017 = vperm.xlu0 %1016, %v60
      %v1018 = vpop.permute.xlu0 %1017
      %1020 = vset.pattern.permute.xlu0 1
      %1021 = vperm.xlu0 %1020, %v61
      %v1022 = vpop.permute.xlu0 %1021
      %1024 = vset.pattern.permute.xlu0 1
      %1025 = vperm.xlu0 %1024, %v62
      %v1026 = vpop.permute.xlu0 %1025
      %1028 = vset.pattern.permute.xlu0 1
      %1029 = vperm.xlu0 %1028, %v63
      %v1030 = vpop.permute.xlu0 %1029
      %1032 = vset.pattern.permute.xlu0 1
      %1033 = vperm.xlu0 %1032, %v64
      %v1034 = vpop.permute.xlu0 %1033
      %1036 = vset.pattern.permute.xlu0 1
      %1037 = vperm.xlu0 %1036, %v65
      %v1038 = vpop.permute.xlu0 %1037
      %1040 = vset.pattern.permute.xlu0 1
      %1041 = vperm.xlu0 %1040, %v66
      %v1042 = vpop.permute.xlu0 %1041
      %1044 = vset.pattern.permute.xlu0 1
      %1045 = vperm.xlu0 %1044, %v67
      %v1046 = vpop.permute.xlu0 %1045
      %1048 = vset.pattern.permute.xlu0 1
      %1049 = vperm.xlu0 %1048, %v68
      %v1050 = vpop.permute.xlu0 %1049
      %1052 = vset.pattern.permute.xlu0 1
      %1053 = vperm.xlu0 %1052, %v69
      %v1054 = vpop.permute.xlu0 %1053
      %1056 = vset.pattern.permute.xlu0 1
      %1057 = vperm.xlu0 %1056, %v70
      %v1058 = vpop.permute.xlu0 %1057
      %1060 = vset.pattern.permute.xlu0 1
      %1061 = vperm.xlu0 %1060, %v71
      %v1062 = vpop.permute.xlu0 %1061
      %1064 = vset.pattern.permute.xlu0 1
      %1065 = vperm.xlu0 %1064, %v72
      %v1066 = vpop.permute.xlu0 %1065
      %1068 = vset.pattern.permute.xlu0 1
      %1069 = vperm.xlu0 %1068, %v73
      %v1070 = vpop.permute.xlu0 %1069
      %1072 = vset.pattern.permute.xlu0 1
      %1073 = vperm.xlu0 %1072, %v74
      %v1074 = vpop.permute.xlu0 %1073
      %1076 = vset.pattern.permute.xlu0 1
      %1077 = vperm.xlu0 %1076, %v75
      %v1078 = vpop.permute.xlu0 %1077
      %1080 = vset.pattern.permute.xlu0 1
      %1081 = vperm.xlu0 %1080, %v76
      %v1082 = vpop.permute.xlu0 %1081
      %1084 = vset.pattern.permute.xlu0 1
      %1085 = vperm.xlu0 %1084, %v77
      %v1086 = vpop.permute.xlu0 %1085
      %1088 = vset.pattern.permute.xlu0 1
      %1089 = vperm.xlu0 %1088, %v78
      %v1090 = vpop.permute.xlu0 %1089
      %1092 = vset.pattern.permute.xlu0 1
      %1093 = vperm.xlu0 %1092, %v79
      %v1094 = vpop.permute.xlu0 %1093
      %1096 = vset.pattern.permute.xlu0 1
      %1097 = vperm.xlu0 %1096, %v80
      %v1098 = vpop.permute.xlu0 %1097
      %1100 = vset.pattern.permute.xlu0 1
      %1101 = vperm.xlu0 %1100, %v81
      %v1102 = vpop.permute.xlu0 %1101
      %1104 = vset.pattern.permute.xlu0 1
      %1105 = vperm.xlu0 %1104, %v82
      %v1106 = vpop.permute.xlu0 %1105
      %1108 = vset.pattern.permute.xlu0 1
      %1109 = vperm.xlu0 %1108, %v83
      %v1110 = vpop.permute.xlu0 %1109
      %1112 = vset.pattern.permute.xlu0 1
      %1113 = vperm.xlu0 %1112, %v84
      %v1114 = vpop.permute.xlu0 %1113
      %1116 = vset.pattern.permute.xlu0 1
      %1117 = vperm.xlu0 %1116, %v85
      %v1118 = vpop.permute.xlu0 %1117
      %1120 = vset.pattern.permute.xlu0 1
      %1121 = vperm.xlu0 %1120, %v86
      %v1122 = vpop.permute.xlu0 %1121
      %1124 = vset.pattern.permute.xlu0 1
      %1125 = vperm.xlu0 %1124, %v87
      %v1126 = vpop.permute.xlu0 %1125
      %1128 = vset.pattern.permute.xlu0 1
      %1129 = vperm.xlu0 %1128, %v88
      %v1130 = vpop.permute.xlu0 %1129
      %1132 = vset.pattern.permute.xlu0 1
      %1133 = vperm.xlu0 %1132, %v89
      %v1134 = vpop.permute.xlu0 %1133
      %1136 = vset.pattern.permute.xlu0 1
      %1137 = vperm.xlu0 %1136, %v90
      %v1138 = vpop.permute.xlu0 %1137
      %1140 = vset.pattern.permute.xlu0 1
      %1141 = vperm.xlu0 %1140, %v91
      %v1142 = vpop.permute.xlu0 %1141
      %1144 = vset.pattern.permute.xlu0 1
      %1145 = vperm.xlu0 %1144, %v92
      %v1146 = vpop.permute.xlu0 %1145
      %1148 = vset.pattern.permute.xlu0 1
      %1149 = vperm.xlu0 %1148, %v93
      %v1150 = vpop.permute.xlu0 %1149
      %1152 = vset.pattern.permute.xlu0 1
      %1153 = vperm.xlu0 %1152, %v94
      %v1154 = vpop.permute.xlu0 %1153
      %1156 = vset.pattern.permute.xlu0 1
      %1157 = vperm.xlu0 %1156, %v95
      %v1158 = vpop.permute.xlu0 %1157
      %1160 = vset.pattern.permute.xlu0 1
      %1161 = vperm.xlu0 %1160, %v96
      %v1162 = vpop.permute.xlu0 %1161
      %1164 = vset.pattern.permute.xlu0 1
      %1165 = vperm.xlu0 %1164, %v97
      %v1166 = vpop.permute.xlu0 %1165
      %1168 = vset.pattern.permute.xlu0 1
      %1169 = vperm.xlu0 %1168, %v98
      %v1170 = vpop.permute.xlu0 %1169
      %1172 = vset.pattern.permute.xlu0 1
      %1173 = vperm.xlu0 %1172, %v99
      %v1174 = vpop.permute.xlu0 %1173
      %1176 = vset.pattern.permute.xlu0 1
      %1177 = vperm.xlu0 %1176, %v100
      %v1178 = vpop.permute.xlu0 %1177
      %1180 = vset.pattern.permute.xlu0 1
      %1181 = vperm.xlu0 %1180, %v101
      %v1182 = vpop.permute.xlu0 %1181
      %1184 = vset.pattern.permute.xlu0 1
      %1185 = vperm.xlu0 %1184, %v102
      %v1186 = vpop.permute.xlu0 %1185
      %1188 = vset.pattern.permute.xlu0 1
      %1189 = vperm.xlu0 %1188, %v103
      %v1190 = vpop.permute.xlu0 %1189
      %1192 = vset.pattern.permute.xlu0 1
      %1193 = vperm.xlu0 %1192, %v104
      %v1194 = vpop.permute.xlu0 %1193
      %1196 = vset.pattern.permute.xlu0 1
      %1197 = vperm.xlu0 %1196, %v105
      %v1198 = vpop.permute.xlu0 %1197
      %1200 = vset.pattern.permute.xlu0 1
      %1201 = vperm.xlu0 %1200, %v106
      %v1202 = vpop.permute.xlu0 %1201
      %1204 = vset.pattern.permute.xlu0 1
      %1205 = vperm.xlu0 %1204, %v107
      %v1206 = vpop.permute.xlu0 %1205
      %1208 = vset.pattern.permute.xlu0 1
      %1209 = vperm.xlu0 %1208, %v108
      %v1210 = vpop.permute.xlu0 %1209
      %1212 = vset.pattern.permute.xlu0 1
      %1213 = vperm.xlu0 %1212, %v109
      %v1214 = vpop.permute.xlu0 %1213
      %1216 = vset.pattern.permute.xlu0 1
      %1217 = vperm.xlu0 %1216, %v110
      %v1218 = vpop.permute.xlu0 %1217
      %1220 = vset.pattern.permute.xlu0 1
      %1221 = vperm.xlu0 %1220, %v111
      %v1222 = vpop.permute.xlu0 %1221
      %1224 = vset.pattern.permute.xlu0 1
      %1225 = vperm.xlu0 %1224, %v112
      %v1226 = vpop.permute.xlu0 %1225
      %1228 = vset.pattern.permute.xlu0 1
      %1229 = vperm.xlu0 %1228, %v113
      %v1230 = vpop.permute.xlu0 %1229
      %1232 = vset.pattern.permute.xlu0 1
      %1233 = vperm.xlu0 %1232, %v114
      %v1234 = vpop.permute.xlu0 %1233
      %1236 = vset.pattern.permute.xlu0 1
      %1237 = vperm.xlu0 %1236, %v115
      %v1238 = vpop.permute.xlu0 %1237
      %1240 = vset.pattern.permute.xlu0 1
      %1241 = vperm.xlu0 %1240, %v116
      %v1242 = vpop.permute.xlu0 %1241
      %1244 = vset.pattern.permute.xlu0 1
      %1245 = vperm.xlu0 %1244, %v117
      %v1246 = vpop.permute.xlu0 %1245
      %1248 = vset.pattern.permute.xlu0 1
      %1249 = vperm.xlu0 %1248, %v118
      %v1250 = vpop.permute.xlu0 %1249
      %vm1252 = vcmp.gt.f32.partialorder %v979, %v998
      %vm1253 = vcmp.gt.f32.partialorder %v983, %v998
      %vm1254 = vcmp.gt.f32.partialorder %v987, %v998
      %vm1255 = vcmp.gt.f32.partialorder %v991, %v998
      %vm1256 = vcmp.gt.f32.partialorder %v979, %v1002
      %vm1257 = vcmp.gt.f32.partialorder %v983, %v1002
      %vm1258 = vcmp.gt.f32.partialorder %v987, %v1002
      %vm1259 = vcmp.gt.f32.partialorder %v991, %v1002
      %vm1260 = vcmp.gt.f32.partialorder %v979, %v1006
      %vm1261 = vcmp.gt.f32.partialorder %v983, %v1006
      %vm1262 = vcmp.gt.f32.partialorder %v987, %v1006
      %vm1263 = vcmp.gt.f32.partialorder %v991, %v1006
      %vm1264 = vcmp.gt.f32.partialorder %v979, %v1010
      %vm1265 = vcmp.gt.f32.partialorder %v983, %v1010
      %vm1266 = vcmp.gt.f32.partialorder %v987, %v1010
      %vm1267 = vcmp.gt.f32.partialorder %v991, %v1010
      %vm1268 = vcmp.gt.f32.partialorder %v979, %v1014
      %vm1269 = vcmp.gt.f32.partialorder %v983, %v1014
      %vm1270 = vcmp.gt.f32.partialorder %v987, %v1014
      %vm1271 = vcmp.gt.f32.partialorder %v991, %v1014
      %vm1272 = vcmp.gt.f32.partialorder %v979, %v1018
      %vm1273 = vcmp.gt.f32.partialorder %v983, %v1018
      %vm1274 = vcmp.gt.f32.partialorder %v987, %v1018
      %vm1275 = vcmp.gt.f32.partialorder %v991, %v1018
      %vm1276 = vcmp.gt.f32.partialorder %v979, %v1022
      %vm1277 = vcmp.gt.f32.partialorder %v983, %v1022
      %vm1278 = vcmp.gt.f32.partialorder %v987, %v1022
      %vm1279 = vcmp.gt.f32.partialorder %v991, %v1022
      %vm1280 = vcmp.gt.f32.partialorder %v979, %v1026
      %vm1281 = vcmp.gt.f32.partialorder %v983, %v1026
      %vm1282 = vcmp.gt.f32.partialorder %v987, %v1026
      %vm1283 = vcmp.gt.f32.partialorder %v991, %v1026
      %vm1284 = vcmp.gt.f32.partialorder %v979, %v1030
      %vm1285 = vcmp.gt.f32.partialorder %v983, %v1030
      %vm1286 = vcmp.gt.f32.partialorder %v987, %v1030
      %vm1287 = vcmp.gt.f32.partialorder %v991, %v1030
      %vm1288 = vcmp.gt.f32.partialorder %v979, %v1034
      %vm1289 = vcmp.gt.f32.partialorder %v983, %v1034
      %vm1290 = vcmp.gt.f32.partialorder %v987, %v1034
      %vm1291 = vcmp.gt.f32.partialorder %v991, %v1034
      %vm1292 = vcmp.gt.f32.partialorder %v979, %v1038
      %vm1293 = vcmp.gt.f32.partialorder %v983, %v1038
      %vm1294 = vcmp.gt.f32.partialorder %v987, %v1038
      %vm1295 = vcmp.gt.f32.partialorder %v991, %v1038
      %vm1296 = vcmp.gt.f32.partialorder %v979, %v1042
      %vm1297 = vcmp.gt.f32.partialorder %v983, %v1042
      %vm1298 = vcmp.gt.f32.partialorder %v987, %v1042
      %vm1299 = vcmp.gt.f32.partialorder %v991, %v1042
      %vm1300 = vcmp.gt.f32.partialorder %v979, %v1046
      %vm1301 = vcmp.gt.f32.partialorder %v983, %v1046
      %vm1302 = vcmp.gt.f32.partialorder %v987, %v1046
      %vm1303 = vcmp.gt.f32.partialorder %v991, %v1046
      %vm1304 = vcmp.gt.f32.partialorder %v979, %v1050
      %vm1305 = vcmp.gt.f32.partialorder %v983, %v1050
      %vm1306 = vcmp.gt.f32.partialorder %v987, %v1050
      %vm1307 = vcmp.gt.f32.partialorder %v991, %v1050
      %vm1308 = vcmp.gt.f32.partialorder %v979, %v1054
      %vm1309 = vcmp.gt.f32.partialorder %v983, %v1054
      %vm1310 = vcmp.gt.f32.partialorder %v987, %v1054
      %vm1311 = vcmp.gt.f32.partialorder %v991, %v1054
      %vm1312 = vcmp.gt.f32.partialorder %v979, %v1058
      %vm1313 = vcmp.gt.f32.partialorder %v983, %v1058
      %vm1314 = vcmp.gt.f32.partialorder %v987, %v1058
      %vm1315 = vcmp.gt.f32.partialorder %v991, %v1058
      %vm1316 = vcmp.gt.f32.partialorder %v979, %v1062
      %vm1317 = vcmp.gt.f32.partialorder %v983, %v1062
      %vm1318 = vcmp.gt.f32.partialorder %v987, %v1062
      %vm1319 = vcmp.gt.f32.partialorder %v991, %v1062
      %vm1320 = vcmp.gt.f32.partialorder %v979, %v1066
      %vm1321 = vcmp.gt.f32.partialorder %v983, %v1066
      %vm1322 = vcmp.gt.f32.partialorder %v987, %v1066
      %vm1323 = vcmp.gt.f32.partialorder %v991, %v1066
      %vm1324 = vcmp.gt.f32.partialorder %v979, %v1070
      %vm1325 = vcmp.gt.f32.partialorder %v983, %v1070
      %vm1326 = vcmp.gt.f32.partialorder %v987, %v1070
      %vm1327 = vcmp.gt.f32.partialorder %v991, %v1070
      %vm1328 = vcmp.gt.f32.partialorder %v979, %v1074
      %vm1329 = vcmp.gt.f32.partialorder %v983, %v1074
      %vm1330 = vcmp.gt.f32.partialorder %v987, %v1074
      %vm1331 = vcmp.gt.f32.partialorder %v991, %v1074
      %vm1332 = vcmp.gt.f32.partialorder %v979, %v1078
      %vm1333 = vcmp.gt.f32.partialorder %v983, %v1078
      %vm1334 = vcmp.gt.f32.partialorder %v987, %v1078
      %vm1335 = vcmp.gt.f32.partialorder %v991, %v1078
      %vm1336 = vcmp.gt.f32.partialorder %v979, %v1082
      %vm1337 = vcmp.gt.f32.partialorder %v983, %v1082
      %vm1338 = vcmp.gt.f32.partialorder %v987, %v1082
      %vm1339 = vcmp.gt.f32.partialorder %v991, %v1082
      %vm1340 = vcmp.gt.f32.partialorder %v979, %v1086
      %vm1341 = vcmp.gt.f32.partialorder %v983, %v1086
      %vm1342 = vcmp.gt.f32.partialorder %v987, %v1086
      %vm1343 = vcmp.gt.f32.partialorder %v991, %v1086
      %vm1344 = vcmp.gt.f32.partialorder %v979, %v1090
      %vm1345 = vcmp.gt.f32.partialorder %v983, %v1090
      %vm1346 = vcmp.gt.f32.partialorder %v987, %v1090
      %vm1347 = vcmp.gt.f32.partialorder %v991, %v1090
      %vm1348 = vcmp.gt.f32.partialorder %v979, %v1094
      %vm1349 = vcmp.gt.f32.partialorder %v983, %v1094
      %vm1350 = vcmp.gt.f32.partialorder %v987, %v1094
      %vm1351 = vcmp.gt.f32.partialorder %v991, %v1094
      %vm1352 = vcmp.gt.f32.partialorder %v979, %v1098
      %vm1353 = vcmp.gt.f32.partialorder %v983, %v1098
      %vm1354 = vcmp.gt.f32.partialorder %v987, %v1098
      %vm1355 = vcmp.gt.f32.partialorder %v991, %v1098
      %vm1356 = vcmp.gt.f32.partialorder %v979, %v1102
      %vm1357 = vcmp.gt.f32.partialorder %v983, %v1102
      %vm1358 = vcmp.gt.f32.partialorder %v987, %v1102
      %vm1359 = vcmp.gt.f32.partialorder %v991, %v1102
      %vm1360 = vcmp.gt.f32.partialorder %v979, %v1106
      %vm1361 = vcmp.gt.f32.partialorder %v983, %v1106
      %vm1362 = vcmp.gt.f32.partialorder %v987, %v1106
      %vm1363 = vcmp.gt.f32.partialorder %v991, %v1106
      %vm1364 = vcmp.gt.f32.partialorder %v979, %v1110
      %vm1365 = vcmp.gt.f32.partialorder %v983, %v1110
      %vm1366 = vcmp.gt.f32.partialorder %v987, %v1110
      %vm1367 = vcmp.gt.f32.partialorder %v991, %v1110
      %vm1368 = vcmp.gt.f32.partialorder %v979, %v1114
      %vm1369 = vcmp.gt.f32.partialorder %v983, %v1114
      %vm1370 = vcmp.gt.f32.partialorder %v987, %v1114
      %vm1371 = vcmp.gt.f32.partialorder %v991, %v1114
      %vm1372 = vcmp.gt.f32.partialorder %v979, %v1118
      %vm1373 = vcmp.gt.f32.partialorder %v983, %v1118
      %vm1374 = vcmp.gt.f32.partialorder %v987, %v1118
      %vm1375 = vcmp.gt.f32.partialorder %v991, %v1118
      %vm1376 = vcmp.gt.f32.partialorder %v979, %v1122
      %vm1377 = vcmp.gt.f32.partialorder %v983, %v1122
      %vm1378 = vcmp.gt.f32.partialorder %v987, %v1122
      %vm1379 = vcmp.gt.f32.partialorder %v991, %v1122
      %vm1380 = vcmp.gt.f32.partialorder %v979, %v1126
      %vm1381 = vcmp.gt.f32.partialorder %v983, %v1126
      %vm1382 = vcmp.gt.f32.partialorder %v987, %v1126
      %vm1383 = vcmp.gt.f32.partialorder %v991, %v1126
      %vm1384 = vcmp.gt.f32.partialorder %v979, %v1130
      %vm1385 = vcmp.gt.f32.partialorder %v983, %v1130
      %vm1386 = vcmp.gt.f32.partialorder %v987, %v1130
      %vm1387 = vcmp.gt.f32.partialorder %v991, %v1130
      %vm1388 = vcmp.gt.f32.partialorder %v979, %v1134
      %vm1389 = vcmp.gt.f32.partialorder %v983, %v1134
      %vm1390 = vcmp.gt.f32.partialorder %v987, %v1134
      %vm1391 = vcmp.gt.f32.partialorder %v991, %v1134
      %vm1392 = vcmp.gt.f32.partialorder %v979, %v1138
      %vm1393 = vcmp.gt.f32.partialorder %v983, %v1138
      %vm1394 = vcmp.gt.f32.partialorder %v987, %v1138
      %vm1395 = vcmp.gt.f32.partialorder %v991, %v1138
      %vm1396 = vcmp.gt.f32.partialorder %v979, %v1142
      %vm1397 = vcmp.gt.f32.partialorder %v983, %v1142
      %vm1398 = vcmp.gt.f32.partialorder %v987, %v1142
      %vm1399 = vcmp.gt.f32.partialorder %v991, %v1142
      %vm1400 = vcmp.gt.f32.partialorder %v979, %v1146
      %vm1401 = vcmp.gt.f32.partialorder %v983, %v1146
      %vm1402 = vcmp.gt.f32.partialorder %v987, %v1146
      %vm1403 = vcmp.gt.f32.partialorder %v991, %v1146
      %vm1404 = vcmp.gt.f32.partialorder %v979, %v1150
      %vm1405 = vcmp.gt.f32.partialorder %v983, %v1150
      %vm1406 = vcmp.gt.f32.partialorder %v987, %v1150
      %vm1407 = vcmp.gt.f32.partialorder %v991, %v1150
      %vm1408 = vcmp.gt.f32.partialorder %v979, %v1154
      %vm1409 = vcmp.gt.f32.partialorder %v983, %v1154
      %vm1410 = vcmp.gt.f32.partialorder %v987, %v1154
      %vm1411 = vcmp.gt.f32.partialorder %v991, %v1154
      %vm1412 = vcmp.gt.f32.partialorder %v979, %v1158
      %vm1413 = vcmp.gt.f32.partialorder %v983, %v1158
      %vm1414 = vcmp.gt.f32.partialorder %v987, %v1158
      %vm1415 = vcmp.gt.f32.partialorder %v991, %v1158
      %vm1416 = vcmp.gt.f32.partialorder %v979, %v1162
      %vm1417 = vcmp.gt.f32.partialorder %v983, %v1162
      %vm1418 = vcmp.gt.f32.partialorder %v987, %v1162
      %vm1419 = vcmp.gt.f32.partialorder %v991, %v1162
      %vm1420 = vcmp.gt.f32.partialorder %v979, %v1166
      %vm1421 = vcmp.gt.f32.partialorder %v983, %v1166
      %vm1422 = vcmp.gt.f32.partialorder %v987, %v1166
      %vm1423 = vcmp.gt.f32.partialorder %v991, %v1166
      %vm1424 = vcmp.gt.f32.partialorder %v979, %v1170
      %vm1425 = vcmp.gt.f32.partialorder %v983, %v1170
      %vm1426 = vcmp.gt.f32.partialorder %v987, %v1170
      %vm1427 = vcmp.gt.f32.partialorder %v991, %v1170
      %vm1428 = vcmp.gt.f32.partialorder %v979, %v1174
      %vm1429 = vcmp.gt.f32.partialorder %v983, %v1174
      %vm1430 = vcmp.gt.f32.partialorder %v987, %v1174
      %vm1431 = vcmp.gt.f32.partialorder %v991, %v1174
      %vm1432 = vcmp.gt.f32.partialorder %v979, %v1178
      %vm1433 = vcmp.gt.f32.partialorder %v983, %v1178
      %vm1434 = vcmp.gt.f32.partialorder %v987, %v1178
      %vm1435 = vcmp.gt.f32.partialorder %v991, %v1178
      %vm1436 = vcmp.gt.f32.partialorder %v979, %v1182
      %vm1437 = vcmp.gt.f32.partialorder %v983, %v1182
      %vm1438 = vcmp.gt.f32.partialorder %v987, %v1182
      %vm1439 = vcmp.gt.f32.partialorder %v991, %v1182
      %vm1440 = vcmp.gt.f32.partialorder %v979, %v1186
      %vm1441 = vcmp.gt.f32.partialorder %v983, %v1186
      %vm1442 = vcmp.gt.f32.partialorder %v987, %v1186
      %vm1443 = vcmp.gt.f32.partialorder %v991, %v1186
      %vm1444 = vcmp.gt.f32.partialorder %v979, %v1190
      %vm1445 = vcmp.gt.f32.partialorder %v983, %v1190
      %vm1446 = vcmp.gt.f32.partialorder %v987, %v1190
      %vm1447 = vcmp.gt.f32.partialorder %v991, %v1190
      %vm1448 = vcmp.gt.f32.partialorder %v979, %v1194
      %vm1449 = vcmp.gt.f32.partialorder %v983, %v1194
      %vm1450 = vcmp.gt.f32.partialorder %v987, %v1194
      %vm1451 = vcmp.gt.f32.partialorder %v991, %v1194
      %vm1452 = vcmp.gt.f32.partialorder %v979, %v1198
      %vm1453 = vcmp.gt.f32.partialorder %v983, %v1198
      %vm1454 = vcmp.gt.f32.partialorder %v987, %v1198
      %vm1455 = vcmp.gt.f32.partialorder %v991, %v1198
      %vm1456 = vcmp.gt.f32.partialorder %v979, %v1202
      %vm1457 = vcmp.gt.f32.partialorder %v983, %v1202
      %vm1458 = vcmp.gt.f32.partialorder %v987, %v1202
      %vm1459 = vcmp.gt.f32.partialorder %v991, %v1202
      %vm1460 = vcmp.gt.f32.partialorder %v979, %v1206
      %vm1461 = vcmp.gt.f32.partialorder %v983, %v1206
      %vm1462 = vcmp.gt.f32.partialorder %v987, %v1206
      %vm1463 = vcmp.gt.f32.partialorder %v991, %v1206
      %vm1464 = vcmp.gt.f32.partialorder %v979, %v1210
      %vm1465 = vcmp.gt.f32.partialorder %v983, %v1210
      %vm1466 = vcmp.gt.f32.partialorder %v987, %v1210
      %vm1467 = vcmp.gt.f32.partialorder %v991, %v1210
      %vm1468 = vcmp.gt.f32.partialorder %v979, %v1214
      %vm1469 = vcmp.gt.f32.partialorder %v983, %v1214
      %vm1470 = vcmp.gt.f32.partialorder %v987, %v1214
      %vm1471 = vcmp.gt.f32.partialorder %v991, %v1214
      %vm1472 = vcmp.gt.f32.partialorder %v979, %v1218
      %vm1473 = vcmp.gt.f32.partialorder %v983, %v1218
      %vm1474 = vcmp.gt.f32.partialorder %v987, %v1218
      %vm1475 = vcmp.gt.f32.partialorder %v991, %v1218
      %vm1476 = vcmp.gt.f32.partialorder %v979, %v1222
      %vm1477 = vcmp.gt.f32.partialorder %v983, %v1222
      %vm1478 = vcmp.gt.f32.partialorder %v987, %v1222
      %vm1479 = vcmp.gt.f32.partialorder %v991, %v1222
      %vm1480 = vcmp.gt.f32.partialorder %v979, %v1226
      %vm1481 = vcmp.gt.f32.partialorder %v983, %v1226
      %vm1482 = vcmp.gt.f32.partialorder %v987, %v1226
      %vm1483 = vcmp.gt.f32.partialorder %v991, %v1226
      %vm1484 = vcmp.gt.f32.partialorder %v979, %v1230
      %vm1485 = vcmp.gt.f32.partialorder %v983, %v1230
      %vm1486 = vcmp.gt.f32.partialorder %v987, %v1230
      %vm1487 = vcmp.gt.f32.partialorder %v991, %v1230
      %vm1488 = vcmp.gt.f32.partialorder %v979, %v1234
      %vm1489 = vcmp.gt.f32.partialorder %v983, %v1234
      %vm1490 = vcmp.gt.f32.partialorder %v987, %v1234
      %vm1491 = vcmp.gt.f32.partialorder %v991, %v1234
      %vm1492 = vcmp.gt.f32.partialorder %v979, %v1238
      %vm1493 = vcmp.gt.f32.partialorder %v983, %v1238
      %vm1494 = vcmp.gt.f32.partialorder %v987, %v1238
      %vm1495 = vcmp.gt.f32.partialorder %v991, %v1238
      %vm1496 = vcmp.gt.f32.partialorder %v979, %v1242
      %vm1497 = vcmp.gt.f32.partialorder %v983, %v1242
      %vm1498 = vcmp.gt.f32.partialorder %v987, %v1242
      %vm1499 = vcmp.gt.f32.partialorder %v991, %v1242
      %vm1500 = vcmp.gt.f32.partialorder %v979, %v1246
      %vm1501 = vcmp.gt.f32.partialorder %v983, %v1246
      %vm1502 = vcmp.gt.f32.partialorder %v987, %v1246
      %vm1503 = vcmp.gt.f32.partialorder %v991, %v1246
      %vm1504 = vcmp.gt.f32.partialorder %v979, %v1250
      %vm1505 = vcmp.gt.f32.partialorder %v983, %v1250
      %vm1506 = vcmp.gt.f32.partialorder %v987, %v1250
      %vm1507 = vcmp.gt.f32.partialorder %v991, %v1250
      %v1508 = vadd.f32 %v719, 1.0
      %v1509 = vadd.f32 %v720, 1.0
      %v1510 = vadd.f32 %v721, 1.0
      %v1511 = vadd.f32 %v722, 1.0
      %v1512 = vadd.f32 %v723, 1.0
      %v1513 = vadd.f32 %v724, 1.0
      %v1514 = vadd.f32 %v725, 1.0
      %v1515 = vadd.f32 %v726, 1.0
      %v1516 = vadd.f32 %v727, 1.0
      %v1517 = vadd.f32 %v728, 1.0
      %v1518 = vadd.f32 %v729, 1.0
      %v1519 = vadd.f32 %v730, 1.0
      %v1520 = vadd.f32 %v731, 1.0
      %v1521 = vadd.f32 %v732, 1.0
      %v1522 = vadd.f32 %v733, 1.0
      %v1523 = vadd.f32 %v734, 1.0
      %v1524 = vadd.f32 %v735, 1.0
      %v1525 = vadd.f32 %v736, 1.0
      %v1526 = vadd.f32 %v737, 1.0
      %v1527 = vadd.f32 %v738, 1.0
      %v1528 = vadd.f32 %v739, 1.0
      %v1529 = vadd.f32 %v740, 1.0
      %v1530 = vadd.f32 %v741, 1.0
      %v1531 = vadd.f32 %v742, 1.0
      %v1532 = vadd.f32 %v743, 1.0
      %v1533 = vadd.f32 %v744, 1.0
      %v1534 = vadd.f32 %v745, 1.0
      %v1535 = vadd.f32 %v746, 1.0
      %v1536 = vadd.f32 %v747, 1.0
      %v1537 = vadd.f32 %v748, 1.0
      %v1538 = vadd.f32 %v749, 1.0
      %v1539 = vadd.f32 %v750, 1.0
      %v1540 = vadd.f32 %v751, 1.0
      %v1541 = vadd.f32 %v752, 1.0
      %v1542 = vadd.f32 %v753, 1.0
      %v1543 = vadd.f32 %v754, 1.0
      %v1544 = vadd.f32 %v755, 1.0
      %v1545 = vadd.f32 %v756, 1.0
      %v1546 = vadd.f32 %v757, 1.0
      %v1547 = vadd.f32 %v758, 1.0
      %v1548 = vadd.f32 %v759, 1.0
      %v1549 = vadd.f32 %v760, 1.0
      %v1550 = vadd.f32 %v761, 1.0
      %v1551 = vadd.f32 %v762, 1.0
      %v1552 = vadd.f32 %v763, 1.0
      %v1553 = vadd.f32 %v764, 1.0
      %v1554 = vadd.f32 %v765, 1.0
      %v1555 = vadd.f32 %v766, 1.0
      %v1556 = vadd.f32 %v767, 1.0
      %v1557 = vadd.f32 %v768, 1.0
      %v1558 = vadd.f32 %v769, 1.0
      %v1559 = vadd.f32 %v770, 1.0
      %v1560 = vadd.f32 %v771, 1.0
      %v1561 = vadd.f32 %v772, 1.0
      %v1562 = vadd.f32 %v773, 1.0
      %v1563 = vadd.f32 %v774, 1.0
      %v1564 = vadd.f32 %v775, 1.0
      %v1565 = vadd.f32 %v776, 1.0
      %v1566 = vadd.f32 %v777, 1.0
      %v1567 = vadd.f32 %v778, 1.0
      %v1568 = vadd.f32 %v779, 1.0
      %v1569 = vadd.f32 %v780, 1.0
      %v1570 = vadd.f32 %v781, 1.0
      %v1571 = vadd.f32 %v782, 1.0
      %v1572 = vadd.f32 %v783, 1.0
      %v1573 = vadd.f32 %v784, 1.0
      %v1574 = vadd.f32 %v785, 1.0
      %v1575 = vadd.f32 %v786, 1.0
      %v1576 = vadd.f32 %v787, 1.0
      %v1577 = vadd.f32 %v788, 1.0
      %v1578 = vadd.f32 %v789, 1.0
      %v1579 = vadd.f32 %v790, 1.0
      %v1580 = vadd.f32 %v791, 1.0
      %v1581 = vadd.f32 %v792, 1.0
      %v1582 = vadd.f32 %v793, 1.0
      %v1583 = vadd.f32 %v794, 1.0
      %v1584 = vadd.f32 %v795, 1.0
      %v1585 = vadd.f32 %v796, 1.0
      %v1586 = vadd.f32 %v797, 1.0
      %v1587 = vadd.f32 %v798, 1.0
      %v1588 = vadd.f32 %v799, 1.0
      %v1589 = vadd.f32 %v800, 1.0
      %v1590 = vadd.f32 %v801, 1.0
      %v1591 = vadd.f32 %v802, 1.0
      %v1592 = vadd.f32 %v803, 1.0
      %v1593 = vadd.f32 %v804, 1.0
      %v1594 = vadd.f32 %v805, 1.0
      %v1595 = vadd.f32 %v806, 1.0
      %v1596 = vadd.f32 %v807, 1.0
      %v1597 = vadd.f32 %v808, 1.0
      %v1598 = vadd.f32 %v809, 1.0
      %v1599 = vadd.f32 %v810, 1.0
      %v1600 = vadd.f32 %v811, 1.0
      %v1601 = vadd.f32 %v812, 1.0
      %v1602 = vadd.f32 %v813, 1.0
      %v1603 = vadd.f32 %v814, 1.0
      %v1604 = vadd.f32 %v815, 1.0
      %v1605 = vadd.f32 %v816, 1.0
      %v1606 = vadd.f32 %v817, 1.0
      %v1607 = vadd.f32 %v818, 1.0
      %v1608 = vadd.f32 %v819, 1.0
      %v1609 = vadd.f32 %v820, 1.0
      %v1610 = vadd.f32 %v821, 1.0
      %v1611 = vadd.f32 %v822, 1.0
      %v1612 = vadd.f32 %v823, 1.0
      %v1613 = vadd.f32 %v824, 1.0
      %v1614 = vadd.f32 %v825, 1.0
      %v1615 = vadd.f32 %v826, 1.0
      %v1616 = vadd.f32 %v827, 1.0
      %v1617 = vadd.f32 %v828, 1.0
      %v1618 = vadd.f32 %v829, 1.0
      %v1619 = vadd.f32 %v830, 1.0
      %v1620 = vadd.f32 %v831, 1.0
      %v1621 = vadd.f32 %v832, 1.0
      %v1622 = vadd.f32 %v833, 1.0
      %v1623 = vadd.f32 %v834, 1.0
      %v1624 = vadd.f32 %v835, 1.0
      %v1625 = vadd.f32 %v836, 1.0
      %v1626 = vadd.f32 %v837, 1.0
      %v1627 = vadd.f32 %v838, 1.0
      %v1628 = vadd.f32 %v839, 1.0
      %v1629 = vadd.f32 %v840, 1.0
      %v1630 = vadd.f32 %v841, 1.0
      %v1631 = vadd.f32 %v842, 1.0
      %v1632 = vadd.f32 %v843, 1.0
      %v1633 = vadd.f32 %v844, 1.0
      %v1634 = vadd.f32 %v845, 1.0
      %v1635 = vadd.f32 %v846, 1.0
      %v1636 = vadd.f32 %v847, 1.0
      %v1637 = vadd.f32 %v848, 1.0
      %v1638 = vadd.f32 %v849, 1.0
      %v1639 = vadd.f32 %v850, 1.0
      %v1640 = vadd.f32 %v851, 1.0
      %v1641 = vadd.f32 %v852, 1.0
      %v1642 = vadd.f32 %v853, 1.0
      %v1643 = vadd.f32 %v854, 1.0
      %v1644 = vadd.f32 %v855, 1.0
      %v1645 = vadd.f32 %v856, 1.0
      %v1646 = vadd.f32 %v857, 1.0
      %v1647 = vadd.f32 %v858, 1.0
      %v1648 = vadd.f32 %v859, 1.0
      %v1649 = vadd.f32 %v860, 1.0
      %v1650 = vadd.f32 %v861, 1.0
      %v1651 = vadd.f32 %v862, 1.0
      %v1652 = vadd.f32 %v863, 1.0
      %v1653 = vadd.f32 %v864, 1.0
      %v1654 = vadd.f32 %v865, 1.0
      %v1655 = vadd.f32 %v866, 1.0
      %v1656 = vadd.f32 %v867, 1.0
      %v1657 = vadd.f32 %v868, 1.0
      %v1658 = vadd.f32 %v869, 1.0
      %v1659 = vadd.f32 %v870, 1.0
      %v1660 = vadd.f32 %v871, 1.0
      %v1661 = vadd.f32 %v872, 1.0
      %v1662 = vadd.f32 %v873, 1.0
      %v1663 = vadd.f32 %v874, 1.0
      %v1664 = vadd.f32 %v875, 1.0
      %v1665 = vadd.f32 %v876, 1.0
      %v1666 = vadd.f32 %v877, 1.0
      %v1667 = vadd.f32 %v878, 1.0
      %v1668 = vadd.f32 %v879, 1.0
      %v1669 = vadd.f32 %v880, 1.0
      %v1670 = vadd.f32 %v881, 1.0
      %v1671 = vadd.f32 %v882, 1.0
      %v1672 = vadd.f32 %v883, 1.0
      %v1673 = vadd.f32 %v884, 1.0
      %v1674 = vadd.f32 %v885, 1.0
      %v1675 = vadd.f32 %v886, 1.0
      %v1676 = vadd.f32 %v887, 1.0
      %v1677 = vadd.f32 %v888, 1.0
      %v1678 = vadd.f32 %v889, 1.0
      %v1679 = vadd.f32 %v890, 1.0
      %v1680 = vadd.f32 %v891, 1.0
      %v1681 = vadd.f32 %v892, 1.0
      %v1682 = vadd.f32 %v893, 1.0
      %v1683 = vadd.f32 %v894, 1.0
      %v1684 = vadd.f32 %v895, 1.0
      %v1685 = vadd.f32 %v896, 1.0
      %v1686 = vadd.f32 %v897, 1.0
      %v1687 = vadd.f32 %v898, 1.0
      %v1688 = vadd.f32 %v899, 1.0
      %v1689 = vadd.f32 %v900, 1.0
      %v1690 = vadd.f32 %v901, 1.0
      %v1691 = vadd.f32 %v902, 1.0
      %v1692 = vadd.f32 %v903, 1.0
      %v1693 = vadd.f32 %v904, 1.0
      %v1694 = vadd.f32 %v905, 1.0
      %v1695 = vadd.f32 %v906, 1.0
      %v1696 = vadd.f32 %v907, 1.0
      %v1697 = vadd.f32 %v908, 1.0
      %v1698 = vadd.f32 %v909, 1.0
      %v1699 = vadd.f32 %v910, 1.0
      %v1700 = vadd.f32 %v911, 1.0
      %v1701 = vadd.f32 %v912, 1.0
      %v1702 = vadd.f32 %v913, 1.0
      %v1703 = vadd.f32 %v914, 1.0
      %v1704 = vadd.f32 %v915, 1.0
      %v1705 = vadd.f32 %v916, 1.0
      %v1706 = vadd.f32 %v917, 1.0
      %v1707 = vadd.f32 %v918, 1.0
      %v1708 = vadd.f32 %v919, 1.0
      %v1709 = vadd.f32 %v920, 1.0
      %v1710 = vadd.f32 %v921, 1.0
      %v1711 = vadd.f32 %v922, 1.0
      %v1712 = vadd.f32 %v923, 1.0
      %v1713 = vadd.f32 %v924, 1.0
      %v1714 = vadd.f32 %v925, 1.0
      %v1715 = vadd.f32 %v926, 1.0
      %v1716 = vadd.f32 %v927, 1.0
      %v1717 = vadd.f32 %v928, 1.0
      %v1718 = vadd.f32 %v929, 1.0
      %v1719 = vadd.f32 %v930, 1.0
      %v1720 = vadd.f32 %v931, 1.0
      %v1721 = vadd.f32 %v932, 1.0
      %v1722 = vadd.f32 %v933, 1.0
      %v1723 = vadd.f32 %v934, 1.0
      %v1724 = vadd.f32 %v935, 1.0
      %v1725 = vadd.f32 %v936, 1.0
      %v1726 = vadd.f32 %v937, 1.0
      %v1727 = vadd.f32 %v938, 1.0
      %v1728 = vadd.f32 %v939, 1.0
      %v1729 = vadd.f32 %v940, 1.0
      %v1730 = vadd.f32 %v941, 1.0
      %v1731 = vadd.f32 %v942, 1.0
      %v1732 = vadd.f32 %v943, 1.0
      %v1733 = vadd.f32 %v944, 1.0
      %v1734 = vadd.f32 %v945, 1.0
      %v1735 = vadd.f32 %v946, 1.0
      %v1736 = vadd.f32 %v947, 1.0
      %v1737 = vadd.f32 %v948, 1.0
      %v1738 = vadd.f32 %v949, 1.0
      %v1739 = vadd.f32 %v950, 1.0
      %v1740 = vadd.f32 %v951, 1.0
      %v1741 = vadd.f32 %v952, 1.0
      %v1742 = vadd.f32 %v953, 1.0
      %v1743 = vadd.f32 %v954, 1.0
      %v1744 = vadd.f32 %v955, 1.0
      %v1745 = vadd.f32 %v956, 1.0
      %v1746 = vadd.f32 %v957, 1.0
      %v1747 = vadd.f32 %v958, 1.0
      %v1748 = vadd.f32 %v959, 1.0
      %v1749 = vadd.f32 %v960, 1.0
      %v1750 = vadd.f32 %v961, 1.0
      %v1751 = vadd.f32 %v962, 1.0
      %v1752 = vadd.f32 %v963, 1.0
      %v1753 = vadd.f32 %v964, 1.0
      %v1754 = vadd.f32 %v965, 1.0
      %v1755 = vadd.f32 %v966, 1.0
      %v1756 = vadd.f32 %v967, 1.0
      %v1757 = vadd.f32 %v968, 1.0
      %v1758 = vadd.f32 %v969, 1.0
      %v1759 = vadd.f32 %v970, 1.0
      %v1760 = vadd.f32 %v971, 1.0
      %v1761 = vadd.f32 %v972, 1.0
      %v1762 = vadd.f32 %v973, 1.0
      %v1763 = vadd.f32 %v974, 1.0
      %v1764 = vsel %vm1252, %v1508, 0.0
      %v1765 = vsel %vm1253, %v1509, 0.0
      %v1766 = vsel %vm1254, %v1510, 0.0
      %v1767 = vsel %vm1255, %v1511, 0.0
      %v1768 = vsel %vm1256, %v1512, 0.0
      %v1769 = vsel %vm1257, %v1513, 0.0
      %v1770 = vsel %vm1258, %v1514, 0.0
      %v1771 = vsel %vm1259, %v1515, 0.0
      %v1772 = vsel %vm1260, %v1516, 0.0
      %v1773 = vsel %vm1261, %v1517, 0.0
      %v1774 = vsel %vm1262, %v1518, 0.0
      %v1775 = vsel %vm1263, %v1519, 0.0
      %v1776 = vsel %vm1264, %v1520, 0.0
      %v1777 = vsel %vm1265, %v1521, 0.0
      %v1778 = vsel %vm1266, %v1522, 0.0
      %v1779 = vsel %vm1267, %v1523, 0.0
      %v1780 = vsel %vm1268, %v1524, 0.0
      %v1781 = vsel %vm1269, %v1525, 0.0
      %v1782 = vsel %vm1270, %v1526, 0.0
      %v1783 = vsel %vm1271, %v1527, 0.0
      %v1784 = vsel %vm1272, %v1528, 0.0
      %v1785 = vsel %vm1273, %v1529, 0.0
      %v1786 = vsel %vm1274, %v1530, 0.0
      %v1787 = vsel %vm1275, %v1531, 0.0
      %v1788 = vsel %vm1276, %v1532, 0.0
      %v1789 = vsel %vm1277, %v1533, 0.0
      %v1790 = vsel %vm1278, %v1534, 0.0
      %v1791 = vsel %vm1279, %v1535, 0.0
      %v1792 = vsel %vm1280, %v1536, 0.0
      %v1793 = vsel %vm1281, %v1537, 0.0
      %v1794 = vsel %vm1282, %v1538, 0.0
      %v1795 = vsel %vm1283, %v1539, 0.0
      %v1796 = vsel %vm1284, %v1540, 0.0
      %v1797 = vsel %vm1285, %v1541, 0.0
      %v1798 = vsel %vm1286, %v1542, 0.0
      %v1799 = vsel %vm1287, %v1543, 0.0
      %v1800 = vsel %vm1288, %v1544, 0.0
      %v1801 = vsel %vm1289, %v1545, 0.0
      %v1802 = vsel %vm1290, %v1546, 0.0
      %v1803 = vsel %vm1291, %v1547, 0.0
      %v1804 = vsel %vm1292, %v1548, 0.0
      %v1805 = vsel %vm1293, %v1549, 0.0
      %v1806 = vsel %vm1294, %v1550, 0.0
      %v1807 = vsel %vm1295, %v1551, 0.0
      %v1808 = vsel %vm1296, %v1552, 0.0
      %v1809 = vsel %vm1297, %v1553, 0.0
      %v1810 = vsel %vm1298, %v1554, 0.0
      %v1811 = vsel %vm1299, %v1555, 0.0
      %v1812 = vsel %vm1300, %v1556, 0.0
      %v1813 = vsel %vm1301, %v1557, 0.0
      %v1814 = vsel %vm1302, %v1558, 0.0
      %v1815 = vsel %vm1303, %v1559, 0.0
      %v1816 = vsel %vm1304, %v1560, 0.0
      %v1817 = vsel %vm1305, %v1561, 0.0
      %v1818 = vsel %vm1306, %v1562, 0.0
      %v1819 = vsel %vm1307, %v1563, 0.0
      %v1820 = vsel %vm1308, %v1564, 0.0
      %v1821 = vsel %vm1309, %v1565, 0.0
      %v1822 = vsel %vm1310, %v1566, 0.0
      %v1823 = vsel %vm1311, %v1567, 0.0
      %v1824 = vsel %vm1312, %v1568, 0.0
      %v1825 = vsel %vm1313, %v1569, 0.0
      %v1826 = vsel %vm1314, %v1570, 0.0
      %v1827 = vsel %vm1315, %v1571, 0.0
      %v1828 = vsel %vm1316, %v1572, 0.0
      %v1829 = vsel %vm1317, %v1573, 0.0
      %v1830 = vsel %vm1318, %v1574, 0.0
      %v1831 = vsel %vm1319, %v1575, 0.0
      %v1832 = vsel %vm1320, %v1576, 0.0
      %v1833 = vsel %vm1321, %v1577, 0.0
      %v1834 = vsel %vm1322, %v1578, 0.0
      %v1835 = vsel %vm1323, %v1579, 0.0
      %v1836 = vsel %vm1324, %v1580, 0.0
      %v1837 = vsel %vm1325, %v1581, 0.0
      %v1838 = vsel %vm1326, %v1582, 0.0
      %v1839 = vsel %vm1327, %v1583, 0.0
      %v1840 = vsel %vm1328, %v1584, 0.0
      %v1841 = vsel %vm1329, %v1585, 0.0
      %v1842 = vsel %vm1330, %v1586, 0.0
      %v1843 = vsel %vm1331, %v1587, 0.0
      %v1844 = vsel %vm1332, %v1588, 0.0
      %v1845 = vsel %vm1333, %v1589, 0.0
      %v1846 = vsel %vm1334, %v1590, 0.0
      %v1847 = vsel %vm1335, %v1591, 0.0
      %v1848 = vsel %vm1336, %v1592, 0.0
      %v1849 = vsel %vm1337, %v1593, 0.0
      %v1850 = vsel %vm1338, %v1594, 0.0
      %v1851 = vsel %vm1339, %v1595, 0.0
      %v1852 = vsel %vm1340, %v1596, 0.0
      %v1853 = vsel %vm1341, %v1597, 0.0
      %v1854 = vsel %vm1342, %v1598, 0.0
      %v1855 = vsel %vm1343, %v1599, 0.0
      %v1856 = vsel %vm1344, %v1600, 0.0
      %v1857 = vsel %vm1345, %v1601, 0.0
      %v1858 = vsel %vm1346, %v1602, 0.0
      %v1859 = vsel %vm1347, %v1603, 0.0
      %v1860 = vsel %vm1348, %v1604, 0.0
      %v1861 = vsel %vm1349, %v1605, 0.0
      %v1862 = vsel %vm1350, %v1606, 0.0
      %v1863 = vsel %vm1351, %v1607, 0.0
      %v1864 = vsel %vm1352, %v1608, 0.0
      %v1865 = vsel %vm1353, %v1609, 0.0
      %v1866 = vsel %vm1354, %v1610, 0.0
      %v1867 = vsel %vm1355, %v1611, 0.0
      %v1868 = vsel %vm1356, %v1612, 0.0
      %v1869 = vsel %vm1357, %v1613, 0.0
      %v1870 = vsel %vm1358, %v1614, 0.0
      %v1871 = vsel %vm1359, %v1615, 0.0
      %v1872 = vsel %vm1360, %v1616, 0.0
      %v1873 = vsel %vm1361, %v1617, 0.0
      %v1874 = vsel %vm1362, %v1618, 0.0
      %v1875 = vsel %vm1363, %v1619, 0.0
      %v1876 = vsel %vm1364, %v1620, 0.0
      %v1877 = vsel %vm1365, %v1621, 0.0
      %v1878 = vsel %vm1366, %v1622, 0.0
      %v1879 = vsel %vm1367, %v1623, 0.0
      %v1880 = vsel %vm1368, %v1624, 0.0
      %v1881 = vsel %vm1369, %v1625, 0.0
      %v1882 = vsel %vm1370, %v1626, 0.0
      %v1883 = vsel %vm1371, %v1627, 0.0
      %v1884 = vsel %vm1372, %v1628, 0.0
      %v1885 = vsel %vm1373, %v1629, 0.0
      %v1886 = vsel %vm1374, %v1630, 0.0
      %v1887 = vsel %vm1375, %v1631, 0.0
      %v1888 = vsel %vm1376, %v1632, 0.0
      %v1889 = vsel %vm1377, %v1633, 0.0
      %v1890 = vsel %vm1378, %v1634, 0.0
      %v1891 = vsel %vm1379, %v1635, 0.0
      %v1892 = vsel %vm1380, %v1636, 0.0
      %v1893 = vsel %vm1381, %v1637, 0.0
      %v1894 = vsel %vm1382, %v1638, 0.0
      %v1895 = vsel %vm1383, %v1639, 0.0
      %v1896 = vsel %vm1384, %v1640, 0.0
      %v1897 = vsel %vm1385, %v1641, 0.0
      %v1898 = vsel %vm1386, %v1642, 0.0
      %v1899 = vsel %vm1387, %v1643, 0.0
      %v1900 = vsel %vm1388, %v1644, 0.0
      %v1901 = vsel %vm1389, %v1645, 0.0
      %v1902 = vsel %vm1390, %v1646, 0.0
      %v1903 = vsel %vm1391, %v1647, 0.0
      %v1904 = vsel %vm1392, %v1648, 0.0
      %v1905 = vsel %vm1393, %v1649, 0.0
      %v1906 = vsel %vm1394, %v1650, 0.0
      %v1907 = vsel %vm1395, %v1651, 0.0
      %v1908 = vsel %vm1396, %v1652, 0.0
      %v1909 = vsel %vm1397, %v1653, 0.0
      %v1910 = vsel %vm1398, %v1654, 0.0
      %v1911 = vsel %vm1399, %v1655, 0.0
      %v1912 = vsel %vm1400, %v1656, 0.0
      %v1913 = vsel %vm1401, %v1657, 0.0
      %v1914 = vsel %vm1402, %v1658, 0.0
      %v1915 = vsel %vm1403, %v1659, 0.0
      %v1916 = vsel %vm1404, %v1660, 0.0
      %v1917 = vsel %vm1405, %v1661, 0.0
      %v1918 = vsel %vm1406, %v1662, 0.0
      %v1919 = vsel %vm1407, %v1663, 0.0
      %v1920 = vsel %vm1408, %v1664, 0.0
      %v1921 = vsel %vm1409, %v1665, 0.0
      %v1922 = vsel %vm1410, %v1666, 0.0
      %v1923 = vsel %vm1411, %v1667, 0.0
      %v1924 = vsel %vm1412, %v1668, 0.0
      %v1925 = vsel %vm1413, %v1669, 0.0
      %v1926 = vsel %vm1414, %v1670, 0.0
      %v1927 = vsel %vm1415, %v1671, 0.0
      %v1928 = vsel %vm1416, %v1672, 0.0
      %v1929 = vsel %vm1417, %v1673, 0.0
      %v1930 = vsel %vm1418, %v1674, 0.0
      %v1931 = vsel %vm1419, %v1675, 0.0
      %v1932 = vsel %vm1420, %v1676, 0.0
      %v1933 = vsel %vm1421, %v1677, 0.0
      %v1934 = vsel %vm1422, %v1678, 0.0
      %v1935 = vsel %vm1423, %v1679, 0.0
      %v1936 = vsel %vm1424, %v1680, 0.0
      %v1937 = vsel %vm1425, %v1681, 0.0
      %v1938 = vsel %vm1426, %v1682, 0.0
      %v1939 = vsel %vm1427, %v1683, 0.0
      %v1940 = vsel %vm1428, %v1684, 0.0
      %v1941 = vsel %vm1429, %v1685, 0.0
      %v1942 = vsel %vm1430, %v1686, 0.0
      %v1943 = vsel %vm1431, %v1687, 0.0
      %v1944 = vsel %vm1432, %v1688, 0.0
      %v1945 = vsel %vm1433, %v1689, 0.0
      %v1946 = vsel %vm1434, %v1690, 0.0
      %v1947 = vsel %vm1435, %v1691, 0.0
      %v1948 = vsel %vm1436, %v1692, 0.0
      %v1949 = vsel %vm1437, %v1693, 0.0
      %v1950 = vsel %vm1438, %v1694, 0.0
      %v1951 = vsel %vm1439, %v1695, 0.0
      %v1952 = vsel %vm1440, %v1696, 0.0
      %v1953 = vsel %vm1441, %v1697, 0.0
      %v1954 = vsel %vm1442, %v1698, 0.0
      %v1955 = vsel %vm1443, %v1699, 0.0
      %v1956 = vsel %vm1444, %v1700, 0.0
      %v1957 = vsel %vm1445, %v1701, 0.0
      %v1958 = vsel %vm1446, %v1702, 0.0
      %v1959 = vsel %vm1447, %v1703, 0.0
      %v1960 = vsel %vm1448, %v1704, 0.0
      %v1961 = vsel %vm1449, %v1705, 0.0
      %v1962 = vsel %vm1450, %v1706, 0.0
      %v1963 = vsel %vm1451, %v1707, 0.0
      %v1964 = vsel %vm1452, %v1708, 0.0
      %v1965 = vsel %vm1453, %v1709, 0.0
      %v1966 = vsel %vm1454, %v1710, 0.0
      %v1967 = vsel %vm1455, %v1711, 0.0
      %v1968 = vsel %vm1456, %v1712, 0.0
      %v1969 = vsel %vm1457, %v1713, 0.0
      %v1970 = vsel %vm1458, %v1714, 0.0
      %v1971 = vsel %vm1459, %v1715, 0.0
      %v1972 = vsel %vm1460, %v1716, 0.0
      %v1973 = vsel %vm1461, %v1717, 0.0
      %v1974 = vsel %vm1462, %v1718, 0.0
      %v1975 = vsel %vm1463, %v1719, 0.0
      %v1976 = vsel %vm1464, %v1720, 0.0
      %v1977 = vsel %vm1465, %v1721, 0.0
      %v1978 = vsel %vm1466, %v1722, 0.0
      %v1979 = vsel %vm1467, %v1723, 0.0
      %v1980 = vsel %vm1468, %v1724, 0.0
      %v1981 = vsel %vm1469, %v1725, 0.0
      %v1982 = vsel %vm1470, %v1726, 0.0
      %v1983 = vsel %vm1471, %v1727, 0.0
      %v1984 = vsel %vm1472, %v1728, 0.0
      %v1985 = vsel %vm1473, %v1729, 0.0
      %v1986 = vsel %vm1474, %v1730, 0.0
      %v1987 = vsel %vm1475, %v1731, 0.0
      %v1988 = vsel %vm1476, %v1732, 0.0
      %v1989 = vsel %vm1477, %v1733, 0.0
      %v1990 = vsel %vm1478, %v1734, 0.0
      %v1991 = vsel %vm1479, %v1735, 0.0
      %v1992 = vsel %vm1480, %v1736, 0.0
      %v1993 = vsel %vm1481, %v1737, 0.0
      %v1994 = vsel %vm1482, %v1738, 0.0
      %v1995 = vsel %vm1483, %v1739, 0.0
      %v1996 = vsel %vm1484, %v1740, 0.0
      %v1997 = vsel %vm1485, %v1741, 0.0
      %v1998 = vsel %vm1486, %v1742, 0.0
      %v1999 = vsel %vm1487, %v1743, 0.0
      %v2000 = vsel %vm1488, %v1744, 0.0
      %v2001 = vsel %vm1489, %v1745, 0.0
      %v2002 = vsel %vm1490, %v1746, 0.0
      %v2003 = vsel %vm1491, %v1747, 0.0
      %v2004 = vsel %vm1492, %v1748, 0.0
      %v2005 = vsel %vm1493, %v1749, 0.0
      %v2006 = vsel %vm1494, %v1750, 0.0
      %v2007 = vsel %vm1495, %v1751, 0.0
      %v2008 = vsel %vm1496, %v1752, 0.0
      %v2009 = vsel %vm1497, %v1753, 0.0
      %v2010 = vsel %vm1498, %v1754, 0.0
      %v2011 = vsel %vm1499, %v1755, 0.0
      %v2012 = vsel %vm1500, %v1756, 0.0
      %v2013 = vsel %vm1501, %v1757, 0.0
      %v2014 = vsel %vm1502, %v1758, 0.0
      %v2015 = vsel %vm1503, %v1759, 0.0
      %v2016 = vsel %vm1504, %v1760, 0.0
      %v2017 = vsel %vm1505, %v1761, 0.0
      %v2018 = vsel %vm1506, %v1762, 0.0
      %v2019 = vsel %vm1507, %v1763, 0.0
      %v2020 = vld [vmem:[#allocation9] sm:$0xf]
      %v2021 = vadd.f32 %v1764, %v1768
      %v2022 = vadd.f32 %v2021, %v1772
      %v2023 = vadd.f32 %v2022, %v1776
      %v2024 = vadd.f32 %v2023, %v1780
      %v2025 = vadd.f32 %v2024, %v1784
      %v2026 = vadd.f32 %v2025, %v1788
      %v2027 = vadd.f32 %v2026, %v1792
      %v2028 = vadd.f32 %v2027, %v1796
      %v2029 = vadd.f32 %v2028, %v1800
      %v2030 = vadd.f32 %v2029, %v1804
      %v2031 = vadd.f32 %v2030, %v1808
      %v2032 = vadd.f32 %v2031, %v1812
      %v2033 = vadd.f32 %v2032, %v1816
      %v2034 = vadd.f32 %v2033, %v1820
      %v2035 = vadd.f32 %v2034, %v1824
      %v2036 = vadd.f32 %v2035, %v1828
      %v2037 = vadd.f32 %v2036, %v1832
      %v2038 = vadd.f32 %v2037, %v1836
      %v2039 = vadd.f32 %v2038, %v1840
      %v2040 = vadd.f32 %v2039, %v1844
      %v2041 = vadd.f32 %v2040, %v1848
      %v2042 = vadd.f32 %v2041, %v1852
      %v2043 = vadd.f32 %v2042, %v1856
      %v2044 = vadd.f32 %v2043, %v1860
      %v2045 = vadd.f32 %v2044, %v1864
      %v2046 = vadd.f32 %v2045, %v1868
      %v2047 = vadd.f32 %v2046, %v1872
      %v2048 = vadd.f32 %v2047, %v1876
      %v2049 = vadd.f32 %v2048, %v1880
      %v2050 = vadd.f32 %v2049, %v1884
      %v2051 = vadd.f32 %v2050, %v1888
      %v2052 = vadd.f32 %v2051, %v1892
      %v2053 = vadd.f32 %v2052, %v1896
      %v2054 = vadd.f32 %v2053, %v1900
      %v2055 = vadd.f32 %v2054, %v1904
      %v2056 = vadd.f32 %v2055, %v1908
      %v2057 = vadd.f32 %v2056, %v1912
      %v2058 = vadd.f32 %v2057, %v1916
      %v2059 = vadd.f32 %v2058, %v1920
      %v2060 = vadd.f32 %v2059, %v1924
      %v2061 = vadd.f32 %v2060, %v1928
      %v2062 = vadd.f32 %v2061, %v1932
      %v2063 = vadd.f32 %v2062, %v1936
      %v2064 = vadd.f32 %v2063, %v1940
      %v2065 = vadd.f32 %v2064, %v1944
      %v2066 = vadd.f32 %v2065, %v1948
      %v2067 = vadd.f32 %v2066, %v1952
      %v2068 = vadd.f32 %v2067, %v1956
      %v2069 = vadd.f32 %v2068, %v1960
      %v2070 = vadd.f32 %v2069, %v1964
      %v2071 = vadd.f32 %v2070, %v1968
      %v2072 = vadd.f32 %v2071, %v1972
      %v2073 = vadd.f32 %v2072, %v1976
      %v2074 = vadd.f32 %v2073, %v1980
      %v2075 = vadd.f32 %v2074, %v1984
      %v2076 = vadd.f32 %v2075, %v1988
      %v2077 = vadd.f32 %v2076, %v1992
      %v2078 = vadd.f32 %v2077, %v1996
      %v2079 = vadd.f32 %v2078, %v2000
      %v2080 = vadd.f32 %v2079, %v2004
      %v2081 = vadd.f32 %v2080, %v2008
      %v2082 = vadd.f32 %v2081, %v2012
      %v2083 = vadd.f32 %v2082, %v2016
      %v2084 = vrot.slane %v2083, 4
      %v2085 = vadd.f32 %v2083, %v2084
      %v2086 = vrot.slane %v2085, 2
      %v2087 = vadd.f32 %v2085, %v2086
      %v2088 = vrot.slane %v2087, 1
      %v2089 = vadd.f32 %v2087, %v2088
      %v2090 = vadd.f32 %v1765, %v1769
      %v2091 = vadd.f32 %v2090, %v1773
      %v2092 = vadd.f32 %v2091, %v1777
      %v2093 = vadd.f32 %v2092, %v1781
      %v2094 = vadd.f32 %v2093, %v1785
      %v2095 = vadd.f32 %v2094, %v1789
      %v2096 = vadd.f32 %v2095, %v1793
      %v2097 = vadd.f32 %v2096, %v1797
      %v2098 = vadd.f32 %v2097, %v1801
      %v2099 = vadd.f32 %v2098, %v1805
      %v2100 = vadd.f32 %v2099, %v1809
      %v2101 = vadd.f32 %v2100, %v1813
      %v2102 = vadd.f32 %v2101, %v1817
      %v2103 = vadd.f32 %v2102, %v1821
      %v2104 = vadd.f32 %v2103, %v1825
      %v2105 = vadd.f32 %v2104, %v1829
      %v2106 = vadd.f32 %v2105, %v1833
      %v2107 = vadd.f32 %v2106, %v1837
      %v2108 = vadd.f32 %v2107, %v1841
      %v2109 = vadd.f32 %v2108, %v1845
      %v2110 = vadd.f32 %v2109, %v1849
      %v2111 = vadd.f32 %v2110, %v1853
      %v2112 = vadd.f32 %v2111, %v1857
      %v2113 = vadd.f32 %v2112, %v1861
      %v2114 = vadd.f32 %v2113, %v1865
      %v2115 = vadd.f32 %v2114, %v1869
      %v2116 = vadd.f32 %v2115, %v1873
      %v2117 = vadd.f32 %v2116, %v1877
      %v2118 = vadd.f32 %v2117, %v1881
      %v2119 = vadd.f32 %v2118, %v1885
      %v2120 = vadd.f32 %v2119, %v1889
      %v2121 = vadd.f32 %v2120, %v1893
      %v2122 = vadd.f32 %v2121, %v1897
      %v2123 = vadd.f32 %v2122, %v1901
      %v2124 = vadd.f32 %v2123, %v1905
      %v2125 = vadd.f32 %v2124, %v1909
      %v2126 = vadd.f32 %v2125, %v1913
      %v2127 = vadd.f32 %v2126, %v1917
      %v2128 = vadd.f32 %v2127, %v1921
      %v2129 = vadd.f32 %v2128, %v1925
      %v2130 = vadd.f32 %v2129, %v1929
      %v2131 = vadd.f32 %v2130, %v1933
      %v2132 = vadd.f32 %v2131, %v1937
      %v2133 = vadd.f32 %v2132, %v1941
      %v2134 = vadd.f32 %v2133, %v1945
      %v2135 = vadd.f32 %v2134, %v1949
      %v2136 = vadd.f32 %v2135, %v1953
      %v2137 = vadd.f32 %v2136, %v1957
      %v2138 = vadd.f32 %v2137, %v1961
      %v2139 = vadd.f32 %v2138, %v1965
      %v2140 = vadd.f32 %v2139, %v1969
      %v2141 = vadd.f32 %v2140, %v1973
      %v2142 = vadd.f32 %v2141, %v1977
      %v2143 = vadd.f32 %v2142, %v1981
      %v2144 = vadd.f32 %v2143, %v1985
      %v2145 = vadd.f32 %v2144, %v1989
      %v2146 = vadd.f32 %v2145, %v1993
      %v2147 = vadd.f32 %v2146, %v1997
      %v2148 = vadd.f32 %v2147, %v2001
      %v2149 = vadd.f32 %v2148, %v2005
      %v2150 = vadd.f32 %v2149, %v2009
      %v2151 = vadd.f32 %v2150, %v2013
      %v2152 = vadd.f32 %v2151, %v2017
      %v2153 = vrot.slane %v2152, 4
      %v2154 = vadd.f32 %v2152, %v2153
      %v2155 = vrot.slane %v2154, 2
      %v2156 = vadd.f32 %v2154, %v2155
      %v2157 = vrot.slane %v2156, 1
      %v2158 = vadd.f32 %v2156, %v2157
      %v2159 = vadd.f32 %v1766, %v1770
      %v2160 = vadd.f32 %v2159, %v1774
      %v2161 = vadd.f32 %v2160, %v1778
      %v2162 = vadd.f32 %v2161, %v1782
      %v2163 = vadd.f32 %v2162, %v1786
      %v2164 = vadd.f32 %v2163, %v1790
      %v2165 = vadd.f32 %v2164, %v1794
      %v2166 = vadd.f32 %v2165, %v1798
      %v2167 = vadd.f32 %v2166, %v1802
      %v2168 = vadd.f32 %v2167, %v1806
      %v2169 = vadd.f32 %v2168, %v1810
      %v2170 = vadd.f32 %v2169, %v1814
      %v2171 = vadd.f32 %v2170, %v1818
      %v2172 = vadd.f32 %v2171, %v1822
      %v2173 = vadd.f32 %v2172, %v1826
      %v2174 = vadd.f32 %v2173, %v1830
      %v2175 = vadd.f32 %v2174, %v1834
      %v2176 = vadd.f32 %v2175, %v1838
      %v2177 = vadd.f32 %v2176, %v1842
      %v2178 = vadd.f32 %v2177, %v1846
      %v2179 = vadd.f32 %v2178, %v1850
      %v2180 = vadd.f32 %v2179, %v1854
      %v2181 = vadd.f32 %v2180, %v1858
      %v2182 = vadd.f32 %v2181, %v1862
      %v2183 = vadd.f32 %v2182, %v1866
      %v2184 = vadd.f32 %v2183, %v1870
      %v2185 = vadd.f32 %v2184, %v1874
      %v2186 = vadd.f32 %v2185, %v1878
      %v2187 = vadd.f32 %v2186, %v1882
      %v2188 = vadd.f32 %v2187, %v1886
      %v2189 = vadd.f32 %v2188, %v1890
      %v2190 = vadd.f32 %v2189, %v1894
      %v2191 = vadd.f32 %v2190, %v1898
      %v2192 = vadd.f32 %v2191, %v1902
      %v2193 = vadd.f32 %v2192, %v1906
      %v2194 = vadd.f32 %v2193, %v1910
      %v2195 = vadd.f32 %v2194, %v1914
      %v2196 = vadd.f32 %v2195, %v1918
      %v2197 = vadd.f32 %v2196, %v1922
      %v2198 = vadd.f32 %v2197, %v1926
      %v2199 = vadd.f32 %v2198, %v1930
      %v2200 = vadd.f32 %v2199, %v1934
      %v2201 = vadd.f32 %v2200, %v1938
      %v2202 = vadd.f32 %v2201, %v1942
      %v2203 = vadd.f32 %v2202, %v1946
      %v2204 = vadd.f32 %v2203, %v1950
      %v2205 = vadd.f32 %v2204, %v1954
      %v2206 = vadd.f32 %v2205, %v1958
      %v2207 = vadd.f32 %v2206, %v1962
      %v2208 = vadd.f32 %v2207, %v1966
      %v2209 = vadd.f32 %v2208, %v1970
      %v2210 = vadd.f32 %v2209, %v1974
      %v2211 = vadd.f32 %v2210, %v1978
      %v2212 = vadd.f32 %v2211, %v1982
      %v2213 = vadd.f32 %v2212, %v1986
      %v2214 = vadd.f32 %v2213, %v1990
      %v2215 = vadd.f32 %v2214, %v1994
      %v2216 = vadd.f32 %v2215, %v1998
      %v2217 = vadd.f32 %v2216, %v2002
      %v2218 = vadd.f32 %v2217, %v2006
      %v2219 = vadd.f32 %v2218, %v2010
      %v2220 = vadd.f32 %v2219, %v2014
      %v2221 = vadd.f32 %v2220, %v2018
      %v2222 = vrot.slane %v2221, 4
      %v2223 = vadd.f32 %v2221, %v2222
      %v2224 = vrot.slane %v2223, 2
      %v2225 = vadd.f32 %v2223, %v2224
      %v2226 = vrot.slane %v2225, 1
      %v2227 = vadd.f32 %v2225, %v2226
      %v2228 = vadd.f32 %v1767, %v1771
      %v2229 = vadd.f32 %v2228, %v1775
      %v2230 = vadd.f32 %v2229, %v1779
      %v2231 = vadd.f32 %v2230, %v1783
      %v2232 = vadd.f32 %v2231, %v1787
      %v2233 = vadd.f32 %v2232, %v1791
      %v2234 = vadd.f32 %v2233, %v1795
      %v2235 = vadd.f32 %v2234, %v1799
      %v2236 = vadd.f32 %v2235, %v1803
      %v2237 = vadd.f32 %v2236, %v1807
      %v2238 = vadd.f32 %v2237, %v1811
      %v2239 = vadd.f32 %v2238, %v1815
      %v2240 = vadd.f32 %v2239, %v1819
      %v2241 = vadd.f32 %v2240, %v1823
      %v2242 = vadd.f32 %v2241, %v1827
      %v2243 = vadd.f32 %v2242, %v1831
      %v2244 = vadd.f32 %v2243, %v1835
      %v2245 = vadd.f32 %v2244, %v1839
      %v2246 = vadd.f32 %v2245, %v1843
      %v2247 = vadd.f32 %v2246, %v1847
      %v2248 = vadd.f32 %v2247, %v1851
      %v2249 = vadd.f32 %v2248, %v1855
      %v2250 = vadd.f32 %v2249, %v1859
      %v2251 = vadd.f32 %v2250, %v1863
      %v2252 = vadd.f32 %v2251, %v1867
      %v2253 = vadd.f32 %v2252, %v1871
      %v2254 = vadd.f32 %v2253, %v1875
      %v2255 = vadd.f32 %v2254, %v1879
      %v2256 = vadd.f32 %v2255, %v1883
      %v2257 = vadd.f32 %v2256, %v1887
      %v2258 = vadd.f32 %v2257, %v1891
      %v2259 = vadd.f32 %v2258, %v1895
      %v2260 = vadd.f32 %v2259, %v1899
      %v2261 = vadd.f32 %v2260, %v1903
      %v2262 = vadd.f32 %v2261, %v1907
      %v2263 = vadd.f32 %v2262, %v1911
      %v2264 = vadd.f32 %v2263, %v1915
      %v2265 = vadd.f32 %v2264, %v1919
      %v2266 = vadd.f32 %v2265, %v1923
      %v2267 = vadd.f32 %v2266, %v1927
      %v2268 = vadd.f32 %v2267, %v1931
      %v2269 = vadd.f32 %v2268, %v1935
      %v2270 = vadd.f32 %v2269, %v1939
      %v2271 = vadd.f32 %v2270, %v1943
      %v2272 = vadd.f32 %v2271, %v1947
      %v2273 = vadd.f32 %v2272, %v1951
      %v2274 = vadd.f32 %v2273, %v1955
      %v2275 = vadd.f32 %v2274, %v1959
      %v2276 = vadd.f32 %v2275, %v1963
      %v2277 = vadd.f32 %v2276, %v1967
      %v2278 = vadd.f32 %v2277, %v1971
      %v2279 = vadd.f32 %v2278, %v1975
      %v2280 = vadd.f32 %v2279, %v1979
      %v2281 = vadd.f32 %v2280, %v1983
      %v2282 = vadd.f32 %v2281, %v1987
      %v2283 = vadd.f32 %v2282, %v1991
      %v2284 = vadd.f32 %v2283, %v1995
      %v2285 = vadd.f32 %v2284, %v1999
      %v2286 = vadd.f32 %v2285, %v2003
      %v2287 = vadd.f32 %v2286, %v2007
      %v2288 = vadd.f32 %v2287, %v2011
      %v2289 = vadd.f32 %v2288, %v2015
      %v2290 = vadd.f32 %v2289, %v2019
      %v2291 = vrot.slane %v2290, 4
      %v2292 = vadd.f32 %v2290, %v2291
      %v2293 = vrot.slane %v2292, 2
      %v2294 = vadd.f32 %v2292, %v2293
      %v2295 = vrot.slane %v2294, 1
      %v2296 = vadd.f32 %v2294, %v2295
      %v2301 = vcombine.low %v2089, %v2158
      %v2302 = vcombine.low %v2227, %v2296
      %v2304 = vunpack.c.l.s4 1966171168
      %v2305 = vunpack.c.0.s8 %v2304
      %v2306 = vlaneseq
      %v2307 = vshrl.u32 %v2306, 7
      %v2308 = vsub.s32 %v2305, %v2307
      %v2309 = vrot.slane %v2301, %v2308
      %v2311 = vunpack.c.l.s4 1966171168
      %v2312 = vunpack.c.0.s8 %v2311
      %v2313 = vlaneseq
      %v2314 = vshrl.u32 %v2313, 7
      %v2315 = vsub.s32 %v2312, %v2314
      %v2316 = vrot.slane %v2302, %v2315
      %v2317 = vcombine.low %v2309, %v2316
      %v2319 = vunpack.c.l.s4 1966171168
      %v2320 = vunpack.c.0.s8 %v2319
      %v2321 = vlaneseq
      %v2322 = vshrl.u32 %v2321, 7
      %v2323 = vsub.s32 %v2320, %v2322
      %v2324 = vrot.slane %v2317, %v2323
      %v2326 = vadd.f32 %v2020, %v2324
      %v2327 = vlaneseq
      %vm2328 = vcmp.ge.s32.totalorder %v2327, 0
      %vm2329 = vcmp.lt.s32.totalorder %v2327, 512
      %vm2330 = vmand %vm2328, %vm2329
      %2331 = vst.msk [vmem:[#allocation9] sm:$0xf] %vm2330, %v2326
    $region25: #{tpu_custom_call.1} parent=1 // pred_fallthru
      _
    // Predicated region
    $region26: #{tpu_custom_call.1} parent=1 // pred_check
      _
    $region27: #{tpu_custom_call.1} parent=1 // pred_check_branch
      %2333 = sbr.rel (0) target = $region29
    $region28: #{tpu_custom_call.1} parent=1 // pred_region
      %s2335 = ssub.s32 64, 64
      %2336 = vsyncadd [#allocation6], %s2335
      %s2338 = sshll.u32 [#allocation9], 4
      %s2339 = int_to_ptr.vmem [resolvable:$true] %s2338
      %2341 = dma.vmem_to_hbm [thread:$0]  %s2339, 64, %s3, [#allocation6]
    $region29: #{tpu_custom_call.1} parent=1 // pred_fallthru
      _
    // Predicated region
    $region30: #{tpu_custom_call.1} parent=1 // pred_check
      _
    $region31: #{tpu_custom_call.1} parent=1 // pred_check_branch
      %2343 = sbr.rel (0) target = $region33
    $region32: #{tpu_custom_call.1} parent=1 // pred_region
      %2344 = dma.done [#allocation6], 64
    $region33: #{tpu_custom_call.1} parent=1 // pred_fallthru
      _
    %2345 = vsyncpa [#allocation5], 1
    %2346 = vsyncpa [#allocation8], 1
    %2347 = vsyncpa [#allocation6], 1

</llo_original>
